<compile_context>
chip_gen: v6e
topology: v6e:2x2x1
jax: 0.10.0
libtpu: 0.0.40
codegen_flags: <defaults>
</compile_context>

<pallas_src>
import functools
import math

import jax
import jax.numpy as jnp
import numpy as np
from jax.experimental import pallas as pl
from jax.experimental.pallas import tpu as pltpu

D_MODEL = 256          # demo size (torch default is 768; kernel is generic in D)
NUM_FREQS = 6
EPS = 1e-6  # TODO(synk): RMSNorm is not defined in the reference snippet; standard
            #             RMSNorm (x * rsqrt(mean(x^2) + eps) * g) with eps=1e-6 is used.

IN_NORMAL = 9                              # 3 vertices * 3 dims
IN_BRDF_EM = 10                            # 7 brdf + 3 emission
PE_SINCOS = IN_NORMAL * NUM_FREQS          # 54 sin (and 54 cos) channels
K_X = 16                                   # sublane/lane-aligned K for the x (include_input) dot
K_Y = 16                                   # aligned K for the brdf||emission dot
K_SIN = 56                                 # aligned K for the sin / cos dots (54 -> 56)

# PositionalEncoding frequencies: exp(linspace(0, num_freqs-1) * pi) (non-trainable buffer).
# Precomputed in float64 then cast, and used identically in kernel and reference so the
# (noise-sensitive) high-frequency phases match bit-for-bit.
FREQS = tuple(float(math.exp(k * math.pi)) for k in range(NUM_FREQS))
_FREQ_ROW = np.concatenate(
    [np.repeat(np.asarray(FREQS, np.float32), IN_NORMAL),
     np.zeros(K_SIN - PE_SINCOS, np.float32)])[None, :]            # (1, 56)

# Torch PE layout is interleaved: [x, sin(f0)x, cos(f0)x, sin(f1)x, cos(f1)x, ...].
# Row index groups of W1 for the split matmul:
_SIN_ROWS = np.concatenate(
    [np.arange(IN_NORMAL) + IN_NORMAL * (1 + 2 * k) for k in range(NUM_FREQS)]).astype(np.int32)
_COS_ROWS = np.concatenate(
    [np.arange(IN_NORMAL) + IN_NORMAL * (2 + 2 * k) for k in range(NUM_FREQS)]).astype(np.int32)


def _rmsnorm(h, g):
    ms = jnp.mean(h * h, axis=-1, keepdims=True)
    return h * jax.lax.rsqrt(ms + EPS) * g


def triangle_embed_kernel(xn_ref, yb_ref, freq_ref, w1x_ref, w1s_ref, w1c_ref,
                          b1_ref, g1_ref, w2_ref, b2_ref, g2_ref, out_ref):
    x16 = xn_ref[...]                                   # (tm, 16): normals | zeros
    x9 = x16[:, :IN_NORMAL]                             # (tm, 9)

    # ---- normal branch: lane-dense PE args -> sin/cos -> split Linear -> RMSNorm ----
    # Arguments are computed exactly as the reference does (f32 multiply of the same
    # f32 frequencies), so the high-frequency phases match bit-for-bit.
    pad = jnp.zeros((x9.shape[0], K_SIN - PE_SINCOS), jnp.float32)
    xrep = jnp.concatenate([x9] * NUM_FREQS + [pad], axis=-1)      # (tm, 56)
    fx = xrep * freq_ref[...]                                      # (1, 56) broadcast
    s = jnp.sin(fx)                                                # pad lanes -> sin(0)=0
    c = jnp.cos(fx)                                                # pad lanes hit zero W1c rows

    h1 = (jnp.dot(x16, w1x_ref[...], preferred_element_type=jnp.float32)
          + jnp.dot(s, w1s_ref[...], preferred_element_type=jnp.float32)
          + jnp.dot(c, w1c_ref[...], preferred_element_type=jnp.float32)
          + b1_ref[...])
    h1 = _rmsnorm(h1, g1_ref[...])

    # ---- brdf + emission branch: Linear(K=16 zero-padded, D) -> RMSNorm -------------
    h2 = jnp.dot(yb_ref[...], w2_ref[...], preferred_element_type=jnp.float32) + b2_ref[...]
    h2 = _rmsnorm(h2, g2_ref[...])

    out_ref[...] = (h1 + h2).astype(out_ref.dtype)


def _round_up(x, m):
    return (x + m - 1) // m * m


@functools.partial(jax.jit, static_argnames=("tm", "out_dtype"))
def triangle_embedding(vertex_normals, brdf_params, emission, params, *,
                       tm=None, out_dtype=jnp.float32):
    """vertex_normals: (B,N,3,3), brdf_params: (B,N,7), emission: (B,N,3)."""
    B, N = vertex_normals.shape[:2]
    M = B * N
    D = params["w1"].shape[1]
    f32 = jnp.float32

    # Tile selection: >= 8 grid steps (and an even count) so both v7x TensorCores get
    # several pipelined iterations; tm <= 512 keeps VMEM usage inside v5e's default
    # scoped limit while staying near the measured HBM roofline.
    if tm is None:
        steps = max(8, pl.cdiv(M, 512))
        steps += steps % 2
        tm_sel = max(8, _round_up(pl.cdiv(M, steps), 8))
        M_pad = tm_sel * steps
    else:
        tm_sel = tm
        M_pad = _round_up(M, tm_sel)
    grid = (M_pad // tm_sel,)

    # Two narrow row-tiled input streams (reshape is free; one pad each handles both the
    # row remainder and the lane alignment) -> far less wrapper HBM traffic than a packed
    # 32-lane array built with two concats.
    xn = vertex_normals.reshape(M, IN_NORMAL).astype(f32)
    xn = jnp.pad(xn, ((0, M_pad - M), (0, K_X - IN_NORMAL)))                 # (M_pad, 16)
    yb = jnp.concatenate([brdf_params.reshape(M, 7), emission.reshape(M, 3)],
                         axis=-1).astype(f32)
    yb = jnp.pad(yb, ((0, M_pad - M), (0, K_Y - IN_BRDF_EM)))                # (M_pad, 16)

    # Split W1 into x / sin / cos row groups (zero-padded to aligned K); W2 padded to 16.
    w1 = params["w1"].astype(f32)
    w1x = jnp.pad(w1[:IN_NORMAL], ((0, K_X - IN_NORMAL), (0, 0)))            # (16, D)
    w1s = jnp.pad(w1[_SIN_ROWS], ((0, K_SIN - PE_SINCOS), (0, 0)))           # (56, D)
    w1c = jnp.pad(w1[_COS_ROWS], ((0, K_SIN - PE_SINCOS), (0, 0)))           # (56, D)
    w2 = jnp.pad(params["w2"].astype(f32), ((0, K_Y - IN_BRDF_EM), (0, 0)))  # (16, D)
    freq_row = jnp.asarray(_FREq_ROW) if False else jnp.asarray(_FREQ_ROW)   # (1, 56)

    row16 = pl.BlockSpec((tm_sel, K_X), lambda i: (i, 0))
    full = lambda r, c: pl.BlockSpec((r, c), lambda i: (0, 0))  # resident, fetched once

    out = pl.pallas_call(
        triangle_embed_kernel,
        out_shape=jax.ShapeDtypeStruct((M_pad, D), out_dtype),
        grid_spec=pltpu.PrefetchScalarGridSpec(
            num_scalar_prefetch=0,
            grid=grid,
            in_specs=[
                row16,                 # vertex normals (tm, 16)
                row16,                 # brdf || emission (tm, 16)
                full(1, K_SIN),        # frequency row
                full(K_X, D),          # W1 rows for x (include_input part)
                full(K_SIN, D),        # W1 rows for sin channels
                full(K_SIN, D),        # W1 rows for cos channels
                full(1, D),            # b1
                full(1, D),            # g1 (RMSNorm weight)
                full(K_Y, D),          # W2 (zero-padded to 16 x D)
                full(1, D),            # b2
                full(1, D),            # g2
            ],
            out_specs=pl.BlockSpec((tm_sel, D), lambda i: (i, 0)),
        ),
        compiler_params=pltpu.CompilerParams(dimension_semantics=("parallel",)),
    )(xn, yb, freq_row, w1x, w1s, w1c,
      params["b1"].astype(f32), params["g1"].astype(f32),
      w2, params["b2"].astype(f32), params["g2"].astype(f32))

    return out[:M].reshape(B, N, D)


def init_params(key, d_model=D_MODEL, num_freqs=NUM_FREQS):
    pe_out = 3 * (1 + 2 * num_freqs)           # 39
    in1 = pe_out * 3                           # 117
    k1, k2, k3, k4 = jax.random.split(key, 4)
    lim1 = 1.0 / math.sqrt(in1)
    lim2 = 1.0 / math.sqrt(10)
    return {
        "w1": jax.random.uniform(k1, (in1, d_model), jnp.float32, -lim1, lim1),
        "b1": jax.random.uniform(k2, (1, d_model), jnp.float32, -lim1, lim1),
        "g1": jnp.ones((1, d_model), jnp.float32),
        "w2": jax.random.uniform(k3, (10, d_model), jnp.float32, -lim2, lim2),
        "b2": jax.random.uniform(k4, (1, d_model), jnp.float32, -lim2, lim2),
        "g2": jnp.ones((1, d_model), jnp.float32),
    }


def reference_forward(vertex_normals, brdf_params, emission, params):
    """Pure-JAX reference in the original torch PE (interleaved sin/cos) layout."""
    B, N = vertex_normals.shape[:2]
    x = vertex_normals.reshape(B * N, 9)
    parts = [x]
    for f in FREQS:
        parts += [jnp.sin(f * x), jnp.cos(f * x)]
    pe = jnp.concatenate(parts, axis=-1)
    h1 = pe @ params["w1"] + params["b1"]
    h1 = h1 * jax.lax.rsqrt(jnp.mean(h1 * h1, -1, keepdims=True) + EPS) * params["g1"]
    y = jnp.concatenate([brdf_params, emission], -1).reshape(B * N, 10)
    h2 = y @ params["w2"] + params["b2"]
    h2 = h2 * jax.lax.rsqrt(jnp.mean(h2 * h2, -1, keepdims=True) + EPS) * params["g2"]
    return (h1 + h2).reshape(B, N, -1)


if __name__ == "__main__":
    key = jax.random.PRNGKey(0)
    kp, kn, kb, ke = jax.random.split(key, 4)

    # N_TRI deliberately not a multiple of the tile size to exercise remainder padding.
    B, N_TRI = 2, 100
    vertex_normals = jax.random.normal(kn, (B, N_TRI, 3, 3), jnp.float32)
    brdf_params = jax.random.uniform(kb, (B, N_TRI, 7), jnp.float32)
    emission = jax.random.uniform(ke, (B, N_TRI, 3), jnp.float32)

    params = init_params(kp)

    out = triangle_embedding(vertex_normals, brdf_params, emission, params)
    out = jax.block_until_ready(out)

    ref = jax.block_until_ready(
        reference_forward(vertex_normals, brdf_params, emission, params))

    assert out.shape == (B, N_TRI, D_MODEL), out.shape
    np.testing.assert_allclose(np.asarray(out), np.asarray(ref), rtol=2e-3, atol=2e-3)

    print("KERNEL_OK")
</pallas_src>

<mosaic_0001>
module attributes {stable_mosaic.version = 11 : i64} {
  func.func @triangle_embed_kernel(%arg0: i32, %arg1: memref<32x16xf32, #tpu.memory_space<vmem>>, %arg2: memref<32x16xf32, #tpu.memory_space<vmem>>, %arg3: memref<1x56xf32, #tpu.memory_space<vmem>>, %arg4: memref<16x256xf32, #tpu.memory_space<vmem>>, %arg5: memref<56x256xf32, #tpu.memory_space<vmem>>, %arg6: memref<56x256xf32, #tpu.memory_space<vmem>>, %arg7: memref<1x256xf32, #tpu.memory_space<vmem>>, %arg8: memref<1x256xf32, #tpu.memory_space<vmem>>, %arg9: memref<16x256xf32, #tpu.memory_space<vmem>>, %arg10: memref<1x256xf32, #tpu.memory_space<vmem>>, %arg11: memref<1x256xf32, #tpu.memory_space<vmem>>, %arg12: memref<32x256xf32, #tpu.memory_space<vmem>>) attributes {dimension_semantics = [#tpu.dimension_semantics<parallel>], iteration_bounds = array<i64: 8>, scalar_prefetch = 0 : i64, scratch_operands = 0 : i64, tpu.core_type = #tpu.core_type<tc>, window_params = [{transform_indices = @transform_0, window_bounds = array<i64: 32, 16>}, {transform_indices = @transform_1, window_bounds = array<i64: 32, 16>}, {pipeline_mode = #tpu.pipeline_mode<synchronous>, transform_indices = @transform_2, window_bounds = array<i64: 1, 56>}, {pipeline_mode = #tpu.pipeline_mode<synchronous>, transform_indices = @transform_3, window_bounds = array<i64: 16, 256>}, {pipeline_mode = #tpu.pipeline_mode<synchronous>, transform_indices = @transform_4, window_bounds = array<i64: 56, 256>}, {pipeline_mode = #tpu.pipeline_mode<synchronous>, transform_indices = @transform_5, window_bounds = array<i64: 56, 256>}, {pipeline_mode = #tpu.pipeline_mode<synchronous>, transform_indices = @transform_6, window_bounds = array<i64: 1, 256>}, {pipeline_mode = #tpu.pipeline_mode<synchronous>, transform_indices = @transform_7, window_bounds = array<i64: 1, 256>}, {pipeline_mode = #tpu.pipeline_mode<synchronous>, transform_indices = @transform_8, window_bounds = array<i64: 16, 256>}, {pipeline_mode = #tpu.pipeline_mode<synchronous>, transform_indices = @transform_9, window_bounds = array<i64: 1, 256>}, {pipeline_mode = #tpu.pipeline_mode<synchronous>, transform_indices = @transform_10, window_bounds = array<i64: 1, 256>}, {transform_indices = @transform_11, window_bounds = array<i64: 32, 256>}]} {
    %c0 = arith.constant 0 : index
    %c0_0 = arith.constant 0 : index
    %0 = vector.load %arg1[%c0, %c0_0] : memref<32x16xf32, #tpu.memory_space<vmem>>, vector<32x16xf32>
    %1 = vector.extract_strided_slice %0 {offsets = [0, 0], sizes = [32, 9], strides = [1, 1]} : vector<32x16xf32> to vector<32x9xf32>
    %cst = arith.constant 0.000000e+00 : f32
    %2 = vector.broadcast %cst : f32 to vector<32x2xf32>
    %3 = tpu.concatenate %1, %1, %1, %1, %1, %1, %2 in 1 : vector<32x9xf32>, vector<32x9xf32>, vector<32x9xf32>, vector<32x9xf32>, vector<32x9xf32>, vector<32x9xf32>, vector<32x2xf32> -> vector<32x56xf32>
    %c0_1 = arith.constant 0 : index
    %c0_2 = arith.constant 0 : index
    %4 = vector.load %arg3[%c0_1, %c0_2] : memref<1x56xf32, #tpu.memory_space<vmem>>, vector<1x56xf32>
    %5 = vector.broadcast %4 : vector<1x56xf32> to vector<32x56xf32>
    %6 = arith.mulf %3, %5 : vector<32x56xf32>
    %7 = math.sin %6 : vector<32x56xf32>
    %8 = math.cos %6 : vector<32x56xf32>
    %c0_3 = arith.constant 0 : index
    %c0_4 = arith.constant 0 : index
    %9 = vector.load %arg4[%c0_3, %c0_4] : memref<16x256xf32, #tpu.memory_space<vmem>>, vector<16x256xf32>
    %cst_5 = arith.constant dense<0.000000e+00> : vector<32x256xf32>
    %10 = tpu.matmul %0, %9, %cst_5 {dimension_numbers = #tpu.dot_dimension_numbers<[1], [0], [0], [1], [0, 0, 1, 1], [], []>} : vector<32x16xf32>, vector<16x256xf32>, vector<32x256xf32> -> vector<32x256xf32>
    %c0_6 = arith.constant 0 : index
    %c0_7 = arith.constant 0 : index
    %11 = vector.load %arg5[%c0_6, %c0_7] : memref<56x256xf32, #tpu.memory_space<vmem>>, vector<56x256xf32>
    %cst_8 = arith.constant dense<0.000000e+00> : vector<32x256xf32>
    %12 = tpu.matmul %7, %11, %cst_8 {dimension_numbers = #tpu.dot_dimension_numbers<[1], [0], [0], [1], [0, 0, 1, 1], [], []>} : vector<32x56xf32>, vector<56x256xf32>, vector<32x256xf32> -> vector<32x256xf32>
    %13 = arith.addf %10, %12 : vector<32x256xf32>
    %c0_9 = arith.constant 0 : index
    %c0_10 = arith.constant 0 : index
    %14 = vector.load %arg6[%c0_9, %c0_10] : memref<56x256xf32, #tpu.memory_space<vmem>>, vector<56x256xf32>
    %cst_11 = arith.constant dense<0.000000e+00> : vector<32x256xf32>
    %15 = tpu.matmul %8, %14, %cst_11 {dimension_numbers = #tpu.dot_dimension_numbers<[1], [0], [0], [1], [0, 0, 1, 1], [], []>} : vector<32x56xf32>, vector<56x256xf32>, vector<32x256xf32> -> vector<32x256xf32>
    %16 = arith.addf %13, %15 : vector<32x256xf32>
    %c0_12 = arith.constant 0 : index
    %c0_13 = arith.constant 0 : index
    %17 = vector.load %arg7[%c0_12, %c0_13] : memref<1x256xf32, #tpu.memory_space<vmem>>, vector<1x256xf32>
    %18 = vector.broadcast %17 : vector<1x256xf32> to vector<32x256xf32>
    %19 = arith.addf %16, %18 : vector<32x256xf32>
    %c0_14 = arith.constant 0 : index
    %c0_15 = arith.constant 0 : index
    %20 = vector.load %arg8[%c0_14, %c0_15] : memref<1x256xf32, #tpu.memory_space<vmem>>, vector<1x256xf32>
    %21 = arith.mulf %19, %19 : vector<32x256xf32>
    %cst_16 = arith.constant dense<0.000000e+00> : vector<32xf32>
    %22 = vector.multi_reduction <add>, %21, %cst_16 [1] : vector<32x256xf32> to vector<32xf32>
    %23 = vector.shape_cast %22 : vector<32xf32> to vector<32x1xf32>
    %cst_17 = arith.constant 2.560000e+02 : f32
    %24 = vector.broadcast %cst_17 : f32 to vector<32x1xf32>
    %25 = arith.divf %23, %24 : vector<32x1xf32>
    %cst_18 = arith.constant 9.99999997E-7 : f32
    %26 = vector.broadcast %cst_18 : f32 to vector<32x1xf32>
    %27 = arith.addf %25, %26 : vector<32x1xf32>
    %28 = math.rsqrt %27 : vector<32x1xf32>
    %29 = vector.broadcast %28 : vector<32x1xf32> to vector<32x256xf32>
    %30 = arith.mulf %19, %29 : vector<32x256xf32>
    %31 = vector.broadcast %20 : vector<1x256xf32> to vector<32x256xf32>
    %32 = arith.mulf %30, %31 : vector<32x256xf32>
    %c0_19 = arith.constant 0 : index
    %c0_20 = arith.constant 0 : index
    %33 = vector.load %arg2[%c0_19, %c0_20] : memref<32x16xf32, #tpu.memory_space<vmem>>, vector<32x16xf32>
    %c0_21 = arith.constant 0 : index
    %c0_22 = arith.constant 0 : index
    %34 = vector.load %arg9[%c0_21, %c0_22] : memref<16x256xf32, #tpu.memory_space<vmem>>, vector<16x256xf32>
    %cst_23 = arith.constant dense<0.000000e+00> : vector<32x256xf32>
    %35 = tpu.matmul %33, %34, %cst_23 {dimension_numbers = #tpu.dot_dimension_numbers<[1], [0], [0], [1], [0, 0, 1, 1], [], []>} : vector<32x16xf32>, vector<16x256xf32>, vector<32x256xf32> -> vector<32x256xf32>
    %c0_24 = arith.constant 0 : index
    %c0_25 = arith.constant 0 : index
    %36 = vector.load %arg10[%c0_24, %c0_25] : memref<1x256xf32, #tpu.memory_space<vmem>>, vector<1x256xf32>
    %37 = vector.broadcast %36 : vector<1x256xf32> to vector<32x256xf32>
    %38 = arith.addf %35, %37 : vector<32x256xf32>
    %c0_26 = arith.constant 0 : index
    %c0_27 = arith.constant 0 : index
    %39 = vector.load %arg11[%c0_26, %c0_27] : memref<1x256xf32, #tpu.memory_space<vmem>>, vector<1x256xf32>
    %40 = arith.mulf %38, %38 : vector<32x256xf32>
    %cst_28 = arith.constant dense<0.000000e+00> : vector<32xf32>
    %41 = vector.multi_reduction <add>, %40, %cst_28 [1] : vector<32x256xf32> to vector<32xf32>
    %42 = vector.shape_cast %41 : vector<32xf32> to vector<32x1xf32>
    %cst_29 = arith.constant 2.560000e+02 : f32
    %43 = vector.broadcast %cst_29 : f32 to vector<32x1xf32>
    %44 = arith.divf %42, %43 : vector<32x1xf32>
    %cst_30 = arith.constant 9.99999997E-7 : f32
    %45 = vector.broadcast %cst_30 : f32 to vector<32x1xf32>
    %46 = arith.addf %44, %45 : vector<32x1xf32>
    %47 = math.rsqrt %46 : vector<32x1xf32>
    %48 = vector.broadcast %47 : vector<32x1xf32> to vector<32x256xf32>
    %49 = arith.mulf %38, %48 : vector<32x256xf32>
    %50 = vector.broadcast %39 : vector<1x256xf32> to vector<32x256xf32>
    %51 = arith.mulf %49, %50 : vector<32x256xf32>
    %52 = arith.addf %32, %51 : vector<32x256xf32>
    %c0_31 = arith.constant 0 : index
    %c0_32 = arith.constant 0 : index
    %53 = vector.load %arg12[%c0_31, %c0_32] : memref<32x256xf32, #tpu.memory_space<vmem>>, vector<32x256xf32>
    tpu.vector_store %arg12[%c0_31, %c0_32], %52 {strides = array<i32>} : memref<32x256xf32, #tpu.memory_space<vmem>>, vector<32x256xf32>,
    return
  }
  func.func @transform_0(%arg0: i32) -> (i32, i32) {
    %c0_i32 = arith.constant 0 : i32
    %c0_i32_0 = arith.constant 0 : i32
    return %arg0, %c0_i32 : i32, i32
  }
  func.func @transform_1(%arg0: i32) -> (i32, i32) {
    %c0_i32 = arith.constant 0 : i32
    %c0_i32_0 = arith.constant 0 : i32
    return %arg0, %c0_i32 : i32, i32
  }
  func.func @transform_2(%arg0: i32) -> (i32, i32) {
    %c0_i32 = arith.constant 0 : i32
    %c0_i32_0 = arith.constant 0 : i32
    %c0_i32_1 = arith.constant 0 : i32
    return %c0_i32, %c0_i32_0 : i32, i32
  }
  func.func @transform_3(%arg0: i32) -> (i32, i32) {
    %c0_i32 = arith.constant 0 : i32
    %c0_i32_0 = arith.constant 0 : i32
    %c0_i32_1 = arith.constant 0 : i32
    return %c0_i32, %c0_i32_0 : i32, i32
  }
  func.func @transform_4(%arg0: i32) -> (i32, i32) {
    %c0_i32 = arith.constant 0 : i32
    %c0_i32_0 = arith.constant 0 : i32
    %c0_i32_1 = arith.constant 0 : i32
    return %c0_i32, %c0_i32_0 : i32, i32
  }
  func.func @transform_5(%arg0: i32) -> (i32, i32) {
    %c0_i32 = arith.constant 0 : i32
    %c0_i32_0 = arith.constant 0 : i32
    %c0_i32_1 = arith.constant 0 : i32
    return %c0_i32, %c0_i32_0 : i32, i32
  }
  func.func @transform_6(%arg0: i32) -> (i32, i32) {
    %c0_i32 = arith.constant 0 : i32
    %c0_i32_0 = arith.constant 0 : i32
    %c0_i32_1 = arith.constant 0 : i32
    return %c0_i32, %c0_i32_0 : i32, i32
  }
  func.func @transform_7(%arg0: i32) -> (i32, i32) {
    %c0_i32 = arith.constant 0 : i32
    %c0_i32_0 = arith.constant 0 : i32
    %c0_i32_1 = arith.constant 0 : i32
    return %c0_i32, %c0_i32_0 : i32, i32
  }
  func.func @transform_8(%arg0: i32) -> (i32, i32) {
    %c0_i32 = arith.constant 0 : i32
    %c0_i32_0 = arith.constant 0 : i32
    %c0_i32_1 = arith.constant 0 : i32
    return %c0_i32, %c0_i32_0 : i32, i32
  }
  func.func @transform_9(%arg0: i32) -> (i32, i32) {
    %c0_i32 = arith.constant 0 : i32
    %c0_i32_0 = arith.constant 0 : i32
    %c0_i32_1 = arith.constant 0 : i32
    return %c0_i32, %c0_i32_0 : i32, i32
  }
  func.func @transform_10(%arg0: i32) -> (i32, i32) {
    %c0_i32 = arith.constant 0 : i32
    %c0_i32_0 = arith.constant 0 : i32
    %c0_i32_1 = arith.constant 0 : i32
    return %c0_i32, %c0_i32_0 : i32, i32
  }
  func.func @transform_11(%arg0: i32) -> (i32, i32) {
    %c0_i32 = arith.constant 0 : i32
    %c0_i32_0 = arith.constant 0 : i32
    return %arg0, %c0_i32 : i32, i32
  }
}

</mosaic_0001>

<llo_original>
// kernel: triangle_embedding.1
$region0: #{triangle_embedding.1}
  #allocation0 [shape = 'u32[]', space=smem, size = 0x4, offset = 0x4, fixed_abs, tag = 'smem constant byte address 0x4 - core index']
  #allocation1 [shape = 'u32[144,128]{1,0:T(1,128)}', space=vmem, size = 0x12000, scoped, tag = 'internal scratch']
  %s0 = inlined_call_operand.vmem [shape: f32[256,16], index: 0, kind: input, shape index: {}]
  %s1 = inlined_call_operand.vmem [shape: f32[256,16], index: 1, kind: input, shape index: {}]
  %s2 = inlined_call_operand.vmem [shape: f32[1,56], index: 2, kind: input, shape index: {}]
  %s3 = inlined_call_operand.vmem [shape: f32[16,256], index: 3, kind: input, shape index: {}]
  %s4 = inlined_call_operand.vmem [shape: f32[56,256], index: 4, kind: input, shape index: {}]
  %s5 = inlined_call_operand.vmem [shape: f32[56,256], index: 5, kind: input, shape index: {}]
  %s6 = inlined_call_operand.vmem [shape: f32[1,256], index: 6, kind: input, shape index: {}]
  %s7 = inlined_call_operand.vmem [shape: f32[1,256], index: 7, kind: input, shape index: {}]
  %s8 = inlined_call_operand.vmem [shape: f32[16,256], index: 8, kind: input, shape index: {}]
  %s9 = inlined_call_operand.vmem [shape: f32[1,256], index: 9, kind: input, shape index: {}]
  %s10 = inlined_call_operand.vmem [shape: f32[1,256], index: 10, kind: input, shape index: {}]
  %s11 = inlined_call_operand.vmem [shape: f32[256,256], index: 11, kind: output, shape index: {}]
  %s12 = sld [smem:[#allocation0]]
  $region77: #{triangle_embedding.1} parent=0
    _
  %s14 = ssub.s32 1, %s12
  %s15 = scalar_select 0, %s14, %s12
  loop: start=0, step=1, limit=10
  $region2: #{triangle_embedding.1} parent=0 // loop_pre_header
    _
  $region3: #{triangle_embedding.1} parent=0 // loop_header
    %s17 = sphi 0, %s21
    %p18 = scmp.ge.s32.totalorder %s17, 10
    %s27 = sphi 0, %s29
    %s30 = sphi 0, %s27
    %s31 = sphi 0, %s30
    %s47 = sphi 0, %s31
    %s53 = sphi 0, %s55
    %s56 = sphi 0, %s53
    %s57 = sphi 0, %s56
    %s73 = sphi 0, %s57
    %s77 = sphi 0, %s77
    %s79 = sphi 0, %s77
    %s80 = sphi 0, %s79
    %s94 = sphi 0, %s80
    %s98 = sphi 0, %s98
    %s100 = sphi 0, %s98
    %s101 = sphi 0, %s100
    %s115 = sphi 0, %s101
    %s119 = sphi 0, %s119
    %s121 = sphi 0, %s119
    %s122 = sphi 0, %s121
    %s136 = sphi 0, %s122
    %s140 = sphi 0, %s140
    %s142 = sphi 0, %s140
    %s143 = sphi 0, %s142
    %s157 = sphi 0, %s143
    %s161 = sphi 0, %s161
    %s163 = sphi 0, %s161
    %s164 = sphi 0, %s163
    %s178 = sphi 0, %s164
    %s182 = sphi 0, %s182
    %s184 = sphi 0, %s182
    %s185 = sphi 0, %s184
    %s199 = sphi 0, %s185
    %s203 = sphi 0, %s203
    %s205 = sphi 0, %s203
    %s206 = sphi 0, %s205
    %s220 = sphi 0, %s206
    %s224 = sphi 0, %s224
    %s226 = sphi 0, %s224
    %s227 = sphi 0, %s226
    %s241 = sphi 0, %s227
    %s245 = sphi 0, %s245
    %s247 = sphi 0, %s245
    %s248 = sphi 0, %s247
    %s262 = sphi 0, %s248
    %s268 = sphi 0, %s270
    %s271 = sphi 0, %s268
    %s272 = sphi 0, %s271
    %s288 = sphi 0, %s272
  $region4: #{triangle_embedding.1} parent=0 // loop_header_branch
    %20 = sbr.rel (%p18) target = $region8
  $region5: #{triangle_embedding.1} parent=0 // loop_body
    %s22 = ssub.s32 %s17, 1
    %s23 = ssub.s32 %s17, 2
    %s24 = sadd.s32 %s17, 1
    %s25 = ssub.s32 %s17, %s24
    %p26 = scmp.eq.s32.totalorder %s25, 0
    %s28 = sadd.s32 %s27, 1
    %s29 = scalar_select %p26, %s27, %s28
    %p32 = pneg %p26
    %p33 = scmp.eq.s32.totalorder %s17, 7
    %p34 = por %p32, %p33
    %p35 = scmp.ne.s32.totalorder %s27, %s30
    %p36 = scmp.eq.s32.totalorder %s17, 0
    %p37 = por %p35, %p36
    %p38 = scmp.ne.s32.totalorder %s27, %s30
    %p39 = scmp.eq.s32.totalorder %s22, 7
    %p40 = por %p38, %p39
    %p41 = scmp.ne.s32.totalorder %s30, %s31
    %p42 = scmp.eq.s32.totalorder %s22, 0
    %p43 = por %p41, %p42
    %p44 = scmp.ne.s32.totalorder %s30, %s31
    %p45 = scmp.eq.s32.totalorder %s23, 7
    %p46 = por %p44, %p45
    %p48 = scmp.ne.s32.totalorder %s31, %s47
    %p49 = scmp.eq.s32.totalorder %s23, 0
    %p50 = por %p48, %p49
    %s51 = ssub.s32 %s17, %s24
    %p52 = scmp.eq.s32.totalorder %s51, 0
    %s54 = sadd.s32 %s53, 1
    %s55 = scalar_select %p52, %s53, %s54
    %p58 = pneg %p52
    %p59 = scmp.eq.s32.totalorder %s17, 7
    %p60 = por %p58, %p59
    %p61 = scmp.ne.s32.totalorder %s53, %s56
    %p62 = scmp.eq.s32.totalorder %s17, 0
    %p63 = por %p61, %p62
    %p64 = scmp.ne.s32.totalorder %s53, %s56
    %p65 = scmp.eq.s32.totalorder %s22, 7
    %p66 = por %p64, %p65
    %p67 = scmp.ne.s32.totalorder %s56, %s57
    %p68 = scmp.eq.s32.totalorder %s22, 0
    %p69 = por %p67, %p68
    %p70 = scmp.ne.s32.totalorder %s56, %s57
    %p71 = scmp.eq.s32.totalorder %s23, 7
    %p72 = por %p70, %p71
    %p74 = scmp.ne.s32.totalorder %s57, %s73
    %p75 = scmp.eq.s32.totalorder %s23, 0
    %p76 = por %p74, %p75
    %s78 = sadd.s32 %s77, 1
    %p81 = scmp.eq.s32.totalorder %s17, 7
    %p82 = scmp.ne.s32.totalorder %s77, %s79
    %p83 = scmp.eq.s32.totalorder %s17, 0
    %p84 = por %p82, %p83
    %p85 = scmp.ne.s32.totalorder %s77, %s79
    %p86 = scmp.eq.s32.totalorder %s22, 7
    %p87 = por %p85, %p86
    %p88 = scmp.ne.s32.totalorder %s79, %s80
    %p89 = scmp.eq.s32.totalorder %s22, 0
    %p90 = por %p88, %p89
    %p91 = scmp.ne.s32.totalorder %s79, %s80
    %p92 = scmp.eq.s32.totalorder %s23, 7
    %p93 = por %p91, %p92
    %p95 = scmp.ne.s32.totalorder %s80, %s94
    %p96 = scmp.eq.s32.totalorder %s23, 0
    %p97 = por %p95, %p96
    %s99 = sadd.s32 %s98, 1
    %p102 = scmp.eq.s32.totalorder %s17, 7
    %p103 = scmp.ne.s32.totalorder %s98, %s100
    %p104 = scmp.eq.s32.totalorder %s17, 0
    %p105 = por %p103, %p104
    %p106 = scmp.ne.s32.totalorder %s98, %s100
    %p107 = scmp.eq.s32.totalorder %s22, 7
    %p108 = por %p106, %p107
    %p109 = scmp.ne.s32.totalorder %s100, %s101
    %p110 = scmp.eq.s32.totalorder %s22, 0
    %p111 = por %p109, %p110
    %p112 = scmp.ne.s32.totalorder %s100, %s101
    %p113 = scmp.eq.s32.totalorder %s23, 7
    %p114 = por %p112, %p113
    %p116 = scmp.ne.s32.totalorder %s101, %s115
    %p117 = scmp.eq.s32.totalorder %s23, 0
    %p118 = por %p116, %p117
    %s120 = sadd.s32 %s119, 1
    %p123 = scmp.eq.s32.totalorder %s17, 7
    %p124 = scmp.ne.s32.totalorder %s119, %s121
    %p125 = scmp.eq.s32.totalorder %s17, 0
    %p126 = por %p124, %p125
    %p127 = scmp.ne.s32.totalorder %s119, %s121
    %p128 = scmp.eq.s32.totalorder %s22, 7
    %p129 = por %p127, %p128
    %p130 = scmp.ne.s32.totalorder %s121, %s122
    %p131 = scmp.eq.s32.totalorder %s22, 0
    %p132 = por %p130, %p131
    %p133 = scmp.ne.s32.totalorder %s121, %s122
    %p134 = scmp.eq.s32.totalorder %s23, 7
    %p135 = por %p133, %p134
    %p137 = scmp.ne.s32.totalorder %s122, %s136
    %p138 = scmp.eq.s32.totalorder %s23, 0
    %p139 = por %p137, %p138
    %s141 = sadd.s32 %s140, 1
    %p144 = scmp.eq.s32.totalorder %s17, 7
    %p145 = scmp.ne.s32.totalorder %s140, %s142
    %p146 = scmp.eq.s32.totalorder %s17, 0
    %p147 = por %p145, %p146
    %p148 = scmp.ne.s32.totalorder %s140, %s142
    %p149 = scmp.eq.s32.totalorder %s22, 7
    %p150 = por %p148, %p149
    %p151 = scmp.ne.s32.totalorder %s142, %s143
    %p152 = scmp.eq.s32.totalorder %s22, 0
    %p153 = por %p151, %p152
    %p154 = scmp.ne.s32.totalorder %s142, %s143
    %p155 = scmp.eq.s32.totalorder %s23, 7
    %p156 = por %p154, %p155
    %p158 = scmp.ne.s32.totalorder %s143, %s157
    %p159 = scmp.eq.s32.totalorder %s23, 0
    %p160 = por %p158, %p159
    %s162 = sadd.s32 %s161, 1
    %p165 = scmp.eq.s32.totalorder %s17, 7
    %p166 = scmp.ne.s32.totalorder %s161, %s163
    %p167 = scmp.eq.s32.totalorder %s17, 0
    %p168 = por %p166, %p167
    %p169 = scmp.ne.s32.totalorder %s161, %s163
    %p170 = scmp.eq.s32.totalorder %s22, 7
    %p171 = por %p169, %p170
    %p172 = scmp.ne.s32.totalorder %s163, %s164
    %p173 = scmp.eq.s32.totalorder %s22, 0
    %p174 = por %p172, %p173
    %p175 = scmp.ne.s32.totalorder %s163, %s164
    %p176 = scmp.eq.s32.totalorder %s23, 7
    %p177 = por %p175, %p176
    %p179 = scmp.ne.s32.totalorder %s164, %s178
    %p180 = scmp.eq.s32.totalorder %s23, 0
    %p181 = por %p179, %p180
    %s183 = sadd.s32 %s182, 1
    %p186 = scmp.eq.s32.totalorder %s17, 7
    %p187 = scmp.ne.s32.totalorder %s182, %s184
    %p188 = scmp.eq.s32.totalorder %s17, 0
    %p189 = por %p187, %p188
    %p190 = scmp.ne.s32.totalorder %s182, %s184
    %p191 = scmp.eq.s32.totalorder %s22, 7
    %p192 = por %p190, %p191
    %p193 = scmp.ne.s32.totalorder %s184, %s185
    %p194 = scmp.eq.s32.totalorder %s22, 0
    %p195 = por %p193, %p194
    %p196 = scmp.ne.s32.totalorder %s184, %s185
    %p197 = scmp.eq.s32.totalorder %s23, 7
    %p198 = por %p196, %p197
    %p200 = scmp.ne.s32.totalorder %s185, %s199
    %p201 = scmp.eq.s32.totalorder %s23, 0
    %p202 = por %p200, %p201
    %s204 = sadd.s32 %s203, 1
    %p207 = scmp.eq.s32.totalorder %s17, 7
    %p208 = scmp.ne.s32.totalorder %s203, %s205
    %p209 = scmp.eq.s32.totalorder %s17, 0
    %p210 = por %p208, %p209
    %p211 = scmp.ne.s32.totalorder %s203, %s205
    %p212 = scmp.eq.s32.totalorder %s22, 7
    %p213 = por %p211, %p212
    %p214 = scmp.ne.s32.totalorder %s205, %s206
    %p215 = scmp.eq.s32.totalorder %s22, 0
    %p216 = por %p214, %p215
    %p217 = scmp.ne.s32.totalorder %s205, %s206
    %p218 = scmp.eq.s32.totalorder %s23, 7
    %p219 = por %p217, %p218
    %p221 = scmp.ne.s32.totalorder %s206, %s220
    %p222 = scmp.eq.s32.totalorder %s23, 0
    %p223 = por %p221, %p222
    %s225 = sadd.s32 %s224, 1
    %p228 = scmp.eq.s32.totalorder %s17, 7
    %p229 = scmp.ne.s32.totalorder %s224, %s226
    %p230 = scmp.eq.s32.totalorder %s17, 0
    %p231 = por %p229, %p230
    %p232 = scmp.ne.s32.totalorder %s224, %s226
    %p233 = scmp.eq.s32.totalorder %s22, 7
    %p234 = por %p232, %p233
    %p235 = scmp.ne.s32.totalorder %s226, %s227
    %p236 = scmp.eq.s32.totalorder %s22, 0
    %p237 = por %p235, %p236
    %p238 = scmp.ne.s32.totalorder %s226, %s227
    %p239 = scmp.eq.s32.totalorder %s23, 7
    %p240 = por %p238, %p239
    %p242 = scmp.ne.s32.totalorder %s227, %s241
    %p243 = scmp.eq.s32.totalorder %s23, 0
    %p244 = por %p242, %p243
    %s246 = sadd.s32 %s245, 1
    %p249 = scmp.eq.s32.totalorder %s17, 7
    %p250 = scmp.ne.s32.totalorder %s245, %s247
    %p251 = scmp.eq.s32.totalorder %s17, 0
    %p252 = por %p250, %p251
    %p253 = scmp.ne.s32.totalorder %s245, %s247
    %p254 = scmp.eq.s32.totalorder %s22, 7
    %p255 = por %p253, %p254
    %p256 = scmp.ne.s32.totalorder %s247, %s248
    %p257 = scmp.eq.s32.totalorder %s22, 0
    %p258 = por %p256, %p257
    %p259 = scmp.ne.s32.totalorder %s247, %s248
    %p260 = scmp.eq.s32.totalorder %s23, 7
    %p261 = por %p259, %p260
    %p263 = scmp.ne.s32.totalorder %s248, %s262
    %p264 = scmp.eq.s32.totalorder %s23, 0
    %p265 = por %p263, %p264
    %s266 = ssub.s32 %s17, %s24
    %p267 = scmp.eq.s32.totalorder %s266, 0
    %s269 = sadd.s32 %s268, 1
    %s270 = scalar_select %p267, %s268, %s269
    %p273 = pneg %p267
    %p274 = scmp.eq.s32.totalorder %s17, 7
    %p275 = por %p273, %p274
    %p276 = scmp.ne.s32.totalorder %s268, %s271
    %p277 = scmp.eq.s32.totalorder %s17, 0
    %p278 = por %p276, %p277
    %p279 = scmp.ne.s32.totalorder %s268, %s271
    %p280 = scmp.eq.s32.totalorder %s22, 7
    %p281 = por %p279, %p280
    %p282 = scmp.ne.s32.totalorder %s271, %s272
    %p283 = scmp.eq.s32.totalorder %s22, 0
    %p284 = por %p282, %p283
    %p285 = scmp.ne.s32.totalorder %s271, %s272
    %p286 = scmp.eq.s32.totalorder %s23, 7
    %p287 = por %p285, %p286
    %p289 = scmp.ne.s32.totalorder %s272, %s288
    %p290 = scmp.eq.s32.totalorder %s23, 0
    %p291 = por %p289, %p290
    %p292 = scmp.le.s32.totalorder 1, %s17
    %p293 = scmp.lt.s32.totalorder %s17, 9
    %p294 = pnand %p292, %p293
    %p295 = pneg %p294
    // Predicated region
    $region9: #{triangle_embedding.1} parent=5 // pred_check
      _
    $region10: #{triangle_embedding.1} parent=5 // pred_check_branch
      %297 = sbr.rel (%p294) target = $region12
    $region11: #{triangle_embedding.1} parent=5 // pred_region
      %s298 = ssub.s32 %s17, 1
      // Predicated region
      $region13: #{triangle_embedding.1} parent=11 // pred_check
        %p299 = pneg %p90
      $region14: #{triangle_embedding.1} parent=11 // pred_check_branch
        %301 = sbr.rel (%p299) target = $region16
      $region15: #{triangle_embedding.1} parent=11 // pred_region
        _
      $region16: #{triangle_embedding.1} parent=11 // pred_fallthru
        _
      // Predicated region
      $region17: #{triangle_embedding.1} parent=11 // pred_check
        %p302 = pneg %p111
      $region18: #{triangle_embedding.1} parent=11 // pred_check_branch
        %304 = sbr.rel (%p302) target = $region20
      $region19: #{triangle_embedding.1} parent=11 // pred_region
        _
      $region20: #{triangle_embedding.1} parent=11 // pred_fallthru
        _
      // Predicated region
      $region21: #{triangle_embedding.1} parent=11 // pred_check
        %p305 = pneg %p132
      $region22: #{triangle_embedding.1} parent=11 // pred_check_branch
        %307 = sbr.rel (%p305) target = $region24
      $region23: #{triangle_embedding.1} parent=11 // pred_region
        _
      $region24: #{triangle_embedding.1} parent=11 // pred_fallthru
        _
      // Predicated region
      $region25: #{triangle_embedding.1} parent=11 // pred_check
        %p308 = pneg %p153
      $region26: #{triangle_embedding.1} parent=11 // pred_check_branch
        %310 = sbr.rel (%p308) target = $region28
      $region27: #{triangle_embedding.1} parent=11 // pred_region
        _
      $region28: #{triangle_embedding.1} parent=11 // pred_fallthru
        _
      // Predicated region
      $region29: #{triangle_embedding.1} parent=11 // pred_check
        %p311 = pneg %p174
      $region30: #{triangle_embedding.1} parent=11 // pred_check_branch
        %313 = sbr.rel (%p311) target = $region32
      $region31: #{triangle_embedding.1} parent=11 // pred_region
        _
      $region32: #{triangle_embedding.1} parent=11 // pred_fallthru
        _
      // Predicated region
      $region33: #{triangle_embedding.1} parent=11 // pred_check
        %p314 = pneg %p195
      $region34: #{triangle_embedding.1} parent=11 // pred_check_branch
        %316 = sbr.rel (%p314) target = $region36
      $region35: #{triangle_embedding.1} parent=11 // pred_region
        _
      $region36: #{triangle_embedding.1} parent=11 // pred_fallthru
        _
      // Predicated region
      $region37: #{triangle_embedding.1} parent=11 // pred_check
        %p317 = pneg %p216
      $region38: #{triangle_embedding.1} parent=11 // pred_check_branch
        %319 = sbr.rel (%p317) target = $region40
      $region39: #{triangle_embedding.1} parent=11 // pred_region
        _
      $region40: #{triangle_embedding.1} parent=11 // pred_fallthru
        _
      // Predicated region
      $region41: #{triangle_embedding.1} parent=11 // pred_check
        %p320 = pneg %p237
      $region42: #{triangle_embedding.1} parent=11 // pred_check_branch
        %322 = sbr.rel (%p320) target = $region44
      $region43: #{triangle_embedding.1} parent=11 // pred_region
        _
      $region44: #{triangle_embedding.1} parent=11 // pred_fallthru
        _
      // Predicated region
      $region45: #{triangle_embedding.1} parent=11 // pred_check
        %p323 = pneg %p258
      $region46: #{triangle_embedding.1} parent=11 // pred_check_branch
        %325 = sbr.rel (%p323) target = $region48
      $region47: #{triangle_embedding.1} parent=11 // pred_region
        _
      $region48: #{triangle_embedding.1} parent=11 // pred_fallthru
        _
    $region12: #{triangle_embedding.1} parent=5 // pred_fallthru
      _
    %p326 = scmp.lt.s32.totalorder %s17, 8
    // Predicated region
    $region49: #{triangle_embedding.1} parent=5 // pred_check
      %p327 = pneg %p326
    $region50: #{triangle_embedding.1} parent=5 // pred_check_branch
      %329 = sbr.rel (%p327) target = $region52
    $region51: #{triangle_embedding.1} parent=5 // pred_region
      // Predicated region
      $region53: #{triangle_embedding.1} parent=51 // pred_check
        %p330 = pneg %p37
      $region54: #{triangle_embedding.1} parent=51 // pred_check_branch
        %332 = sbr.rel (%p330) target = $region56
      $region55: #{triangle_embedding.1} parent=51 // pred_region
        %s333 = smul.u32 4, %s17
        %p334 = scmp.lt.s32.totalorder %s333, 31
        %s335 = scalar_select %p334, %s333, 31
        %s336 = smul.addr %s335, 8
        %s337 = scalar_lea.vmem %s0, %s336
        %s338 = smul.u32 4, %s17
      $region56: #{triangle_embedding.1} parent=51 // pred_fallthru
        _
      // Predicated region
      $region57: #{triangle_embedding.1} parent=51 // pred_check
        %p339 = pneg %p63
      $region58: #{triangle_embedding.1} parent=51 // pred_check_branch
        %341 = sbr.rel (%p339) target = $region60
      $region59: #{triangle_embedding.1} parent=51 // pred_region
        %s342 = smul.u32 4, %s17
        %p343 = scmp.lt.s32.totalorder %s342, 31
        %s344 = scalar_select %p343, %s342, 31
        %s345 = smul.addr %s344, 8
        %s346 = scalar_lea.vmem %s1, %s345
        %s347 = smul.u32 4, %s17
      $region60: #{triangle_embedding.1} parent=51 // pred_fallthru
        _
    $region52: #{triangle_embedding.1} parent=5 // pred_fallthru
      _
    %p348 = scmp.le.s32.totalorder 1, %s17
    %p349 = scmp.lt.s32.totalorder %s17, 9
    %p350 = pnand %p348, %p349
    %p351 = pneg %p350
    // Predicated region
    $region61: #{triangle_embedding.1} parent=5 // pred_check
      _
    $region62: #{triangle_embedding.1} parent=5 // pred_check_branch
      %353 = sbr.rel (%p350) target = $region64
    $region63: #{triangle_embedding.1} parent=5 // pred_region
      %s354 = ssub.s32 %s17, 1
      %s355 = smul.u32 4, %s22
      %p356 = scmp.lt.s32.totalorder %s355, 31
      %s357 = scalar_select %p356, %s355, 31
      %s358 = smul.addr %s357, 8
      %s359 = scalar_lea.vmem %s0, %s358
      %p360 = pneg %p43
      %p361 = pneg %p40
      %s362 = smul.u32 4, %s22
      %p363 = scmp.lt.s32.totalorder %s362, 31
      %s364 = scalar_select %p363, %s362, 31
      %s365 = smul.addr %s364, 8
      %s366 = scalar_lea.vmem %s1, %s365
      %p367 = pneg %p69
      %p368 = pneg %p66
      %p369 = pneg %p90
      %p370 = pneg %p87
      %p371 = pneg %p111
      %p372 = pneg %p108
      %p373 = pneg %p132
      %p374 = pneg %p129
      %p375 = pneg %p153
      %p376 = pneg %p150
      %p377 = pneg %p174
      %p378 = pneg %p171
      %p379 = pneg %p195
      %p380 = pneg %p192
      %p381 = pneg %p216
      %p382 = pneg %p213
      %p383 = pneg %p237
      %p384 = pneg %p234
      %p385 = pneg %p258
      %p386 = pneg %p255
      %p387 = pneg %p284
      %p388 = pneg %p281
      %s389 = smul.u32 4, %s22
      %p390 = scmp.lt.s32.totalorder %s389, 31
      %s391 = scalar_select %p390, %s389, 31
      %s392 = smul.addr %s391, 2
      %s393 = smul.addr %s392, 8
      %s394 = scalar_lea.vmem %s11, %s393
      %s395 = smul.u32 4, %s22
      %p396 = scmp.lt.s32.totalorder %s395, 31
      %s397 = scalar_select %p396, %s395, 31
      %s398 = smul.addr %s397, 8
      %s399 = scalar_lea.vmem %s0, %s398
      %s400 = smul.u32 4, %s22
      %s401 = smul.u32 4, %s22
      %p402 = scmp.lt.s32.totalorder %s401, 31
      %s403 = scalar_select %p402, %s401, 31
      %s404 = smul.addr %s403, 8
      %s405 = scalar_lea.vmem %s1, %s404
      %s406 = smul.u32 4, %s22
      %s407 = smul.u32 4, %s22
      %p408 = scmp.lt.s32.totalorder %s407, 31
      %s409 = scalar_select %p408, %s407, 31
      %s410 = smul.addr %s409, 2
      %s411 = smul.addr %s410, 8
      %s412 = scalar_lea.vmem %s11, %s411
      %s413 = smul.u32 4, %s22
      %v414 = vld [vmem:[%s399] sm:$0xff]
      %v415 = vld [vmem:[%s399 + $0x8] sm:$0xff]
      %v416 = vld [vmem:[%s399 + $0x10] sm:$0xff]
      %v417 = vld [vmem:[%s399 + $0x18] sm:$0xff]
      %422 = vrot.lane.b32.xlu0 %v414, 9
      %v423 = vpop.permute.xlu0 %422
      %424 = vrot.lane.b32.xlu0 %v415, 9
      %v425 = vpop.permute.xlu0 %424
      %426 = vrot.lane.b32.xlu0 %v416, 9
      %v427 = vpop.permute.xlu0 %426
      %428 = vrot.lane.b32.xlu0 %v417, 9
      %v429 = vpop.permute.xlu0 %428
      %434 = vrot.lane.b32.xlu0 %v414, 18
      %v435 = vpop.permute.xlu0 %434
      %436 = vrot.lane.b32.xlu0 %v415, 18
      %v437 = vpop.permute.xlu0 %436
      %438 = vrot.lane.b32.xlu0 %v416, 18
      %v439 = vpop.permute.xlu0 %438
      %440 = vrot.lane.b32.xlu0 %v417, 18
      %v441 = vpop.permute.xlu0 %440
      %446 = vrot.lane.b32.xlu0 %v414, 27
      %v447 = vpop.permute.xlu0 %446
      %448 = vrot.lane.b32.xlu0 %v415, 27
      %v449 = vpop.permute.xlu0 %448
      %450 = vrot.lane.b32.xlu0 %v416, 27
      %v451 = vpop.permute.xlu0 %450
      %452 = vrot.lane.b32.xlu0 %v417, 27
      %v453 = vpop.permute.xlu0 %452
      %458 = vrot.lane.b32.xlu0 %v414, 36
      %v459 = vpop.permute.xlu0 %458
      %460 = vrot.lane.b32.xlu0 %v415, 36
      %v461 = vpop.permute.xlu0 %460
      %462 = vrot.lane.b32.xlu0 %v416, 36
      %v463 = vpop.permute.xlu0 %462
      %464 = vrot.lane.b32.xlu0 %v417, 36
      %v465 = vpop.permute.xlu0 %464
      %470 = vrot.lane.b32.xlu0 %v414, 45
      %v471 = vpop.permute.xlu0 %470
      %472 = vrot.lane.b32.xlu0 %v415, 45
      %v473 = vpop.permute.xlu0 %472
      %474 = vrot.lane.b32.xlu0 %v416, 45
      %v475 = vpop.permute.xlu0 %474
      %476 = vrot.lane.b32.xlu0 %v417, 45
      %v477 = vpop.permute.xlu0 %476
      %vm482 = vcmask 72704
      %v483 = vsel %vm482, %v414, %v423
      %v484 = vsel %vm482, %v415, %v425
      %v485 = vsel %vm482, %v416, %v427
      %v486 = vsel %vm482, %v417, %v429
      %vm487 = vcmask 146432
      %v488 = vsel %vm487, %v483, %v435
      %v489 = vsel %vm487, %v484, %v437
      %v490 = vsel %vm487, %v485, %v439
      %v491 = vsel %vm487, %v486, %v441
      %vm492 = vcmask 220160
      %v493 = vsel %vm492, %v488, %v447
      %v494 = vsel %vm492, %v489, %v449
      %v495 = vsel %vm492, %v490, %v451
      %v496 = vsel %vm492, %v491, %v453
      %vm497 = vcmask 293888
      %v498 = vsel %vm497, %v493, %v459
      %v499 = vsel %vm497, %v494, %v461
      %v500 = vsel %vm497, %v495, %v463
      %v501 = vsel %vm497, %v496, %v465
      %vm502 = vcmask 367616
      %v503 = vsel %vm502, %v498, %v471
      %v504 = vsel %vm502, %v499, %v473
      %v505 = vsel %vm502, %v500, %v475
      %v506 = vsel %vm502, %v501, %v477
      %vm507 = vcmask 441344
      %v508 = vsel %vm507, %v503, 0.0
      %v509 = vsel %vm507, %v504, 0.0
      %v510 = vsel %vm507, %v505, 0.0
      %v511 = vsel %vm507, %v506, 0.0
      %v512 = vld [vmem:[%s2] sm:$0x1]
      %v514 = vlaneseq
      %v515 = vshrl.u32 %v514, 7
      %v516 = vsub.s32 0, %v515
      %v517 = vrot.slane %v512, %v516
      %v519 = vmul.f32 %v508, %v517
      %v520 = vmul.f32 %v509, %v517
      %v521 = vmul.f32 %v510, %v517
      %v522 = vmul.f32 %v511, %v517
      %v523 = vand.u32 2147483647, %v519
      %vm524 = vcmp.le.f32.partialorder %v523, 0.7853982
      %vm525 = vcmp.lt.s32.totalorder %v519, 0
      %v526 = vand.u32 %v519, 2139095040
      %v527 = vshrl.u32 %v526, 23
      %v528 = vsub.s32 %v527, 127
      %v529 = vand.u32 2147483647, %v519
      %v530 = vand.u32 %v529, 8388607
      %v531 = vor.u32 %v530, 8388608
      %v532 = vsub.s32 0, %v531
      %v533 = vadd.s32 %v528, 1
      %vm534 = vcmp.gt.s32.totalorder %v533, 0
      %v535 = vsel %vm534, %v533, 0
      %v536 = vshrl.u32 %v535, 5
      %v537 = vand.u32 %v535, 31
      %v538 = vsub.s32 32, %v537
      %v539 = vshrl.u32 683565275, %v538
      %v540 = vshll.u32 683565275, %v537
      %v541 = vshrl.u32 2475754826, %v538
      %v542 = vor.u32 %v540, %v541
      %v543 = vshll.u32 2475754826, %v537
      %v544 = vshrl.u32 2131351028, %v538
      %v545 = vor.u32 %v543, %v544
      %v546 = vshll.u32 2131351028, %v537
      %v547 = vshrl.u32 2102212464, %v538
      %v548 = vor.u32 %v546, %v547
      %v549 = vshll.u32 2102212464, %v537
      %v550 = vshrl.u32 920167782, %v538
      %v551 = vor.u32 %v549, %v550
      %v552 = vshll.u32 920167782, %v537
      %v553 = vshrl.u32 1326507024, %v538
      %v554 = vor.u32 %v552, %v553
      %vm555 = vcmp.lt.s32.totalorder %v536, 1
      %vm556 = vcmp.lt.s32.totalorder %v536, 2
      %vm557 = vcmp.lt.s32.totalorder %v536, 3
      %vm558 = vcmp.lt.s32.totalorder %v536, 4
      %v559 = vsel %vm555, %v539, %v542
      %v560 = vsel %vm558, %v548, 2102212464
      %v561 = vsel %vm557, %v545, %v560
      %v562 = vsel %vm556, %v559, %v561
      %v563 = vsel %vm555, %v542, %v545
      %v564 = vsel %vm558, %v551, 920167782
      %v565 = vsel %vm557, %v548, %v564
      %v566 = vsel %vm556, %v563, %v565
      %v567 = vsel %vm555, %v545, %v548
      %v568 = vsel %vm558, %v554, 1326507024
      %v569 = vsel %vm557, %v551, %v568
      %v570 = vsel %vm556, %v567, %v569
      %v571 = vshll.u32 %v531, 8
      %v572 = vmul.u32.u64.compose %v571, %v570
      %v573 = vextract.low.u32 %v572
      %v574 = vextract.high.u32 %v572
      %v575 = vmul.u32.u64.compose %v571, %v566
      %v576 = vextract.low.u32 %v575
      %v577 = vextract.high.u32 %v575
      %v578 = vmul.u32 %v571, %v562
      %v579 = vadd.s32 %v574, %v576
      %vm580 = vc.u32 %v574, %v576
      %v581 = vadd.s32 %v577, 1
      %v582 = vsel %vm580, %v581, %v577
      %v583 = vadd.s32 %v578, %v582
      %v584 = vadd.s32 %v583, 536870912
      %v585 = vshrl.u32 %v584, 30
      %v586 = vshll.u32 %v585, 30
      %v587 = vsub.s32 %v583, %v586
      %vm588 = vcmp.lt.s32.totalorder %v587, 0
      %v589 = vsub.s32 0, %v587
      %v590 = vsel %vm588, %v589, %v587
      %v591 = vclz %v590
      %v592 = vsub.s32 %v591, 2
      %vm593 = vcmp.gt.s32.totalorder 0, %v592
      %v594 = vsel %vm593, 0, %v592
      %v595 = vsub.s32 32, %v594
      %v596 = vshll.u32 %v587, %v594
      %v597 = vshrl.u32 %v579, %v595
      %v598 = vor.u32 %v596, %v597
      %v599 = vsub.s32 4294967266, %v594
      %v600 = vadd.s32 %v599, 127
      %v601 = vshll.u32 %v600, 23
      %v602 = vor.u32 4788187, %v601
      %v603 = vand.u32 2147483647, %v602
      %v605 = vcvt.s32.f32 %v598
      %v606 = vmul.f32 %v605, %v603
      %v607 = vxor.u32 %v606, 2147483648
      %v608 = vsel %vm525, %v607, %v606
      %v609 = vsub.s32 4, %v585
      %v610 = vsel %vm525, %v609, %v585
      %v611 = vsel %vm524, %v519, %v608
      %v612 = vsel %vm524, 0, %v610
      %v613 = vcosq.f32.pop %v611
      %v614 = vsinq.f32.pop %v611
      %vm615 = vweird.f32 %v519
      %v616 = vadd.s32 %v612, 3
      %v617 = vand.u32 %v616, 3
      %vm618 = vcmp.lt.s32.totalorder %v617, 2
      %vm619 = vcmp.eq.s32.totalorder %v617, 0
      %v620 = vxor.u32 %v614, 2147483648
      %v621 = vsel %vm619, %v613, %v620
      %vm622 = vcmp.eq.s32.totalorder %v617, 2
      %v623 = vxor.u32 %v613, 2147483648
      %v624 = vsel %vm622, %v623, %v614
      %v625 = vsel %vm618, %v621, %v624
      %v626 = vsel %vm615, nan, %v625
      %v627 = vand.u32 2147483647, %v520
      %vm628 = vcmp.le.f32.partialorder %v627, 0.7853982
      %vm629 = vcmp.lt.s32.totalorder %v520, 0
      %v630 = vand.u32 %v520, 2139095040
      %v631 = vshrl.u32 %v630, 23
      %v632 = vsub.s32 %v631, 127
      %v633 = vand.u32 2147483647, %v520
      %v634 = vand.u32 %v633, 8388607
      %v635 = vor.u32 %v634, 8388608
      %v636 = vsub.s32 0, %v635
      %v637 = vadd.s32 %v632, 1
      %vm638 = vcmp.gt.s32.totalorder %v637, 0
      %v639 = vsel %vm638, %v637, 0
      %v640 = vshrl.u32 %v639, 5
      %v641 = vand.u32 %v639, 31
      %v642 = vsub.s32 32, %v641
      %v643 = vshrl.u32 683565275, %v642
      %v644 = vshll.u32 683565275, %v641
      %v645 = vshrl.u32 2475754826, %v642
      %v646 = vor.u32 %v644, %v645
      %v647 = vshll.u32 2475754826, %v641
      %v648 = vshrl.u32 2131351028, %v642
      %v649 = vor.u32 %v647, %v648
      %v650 = vshll.u32 2131351028, %v641
      %v651 = vshrl.u32 2102212464, %v642
      %v652 = vor.u32 %v650, %v651
      %v653 = vshll.u32 2102212464, %v641
      %v654 = vshrl.u32 920167782, %v642
      %v655 = vor.u32 %v653, %v654
      %v656 = vshll.u32 920167782, %v641
      %v657 = vshrl.u32 1326507024, %v642
      %v658 = vor.u32 %v656, %v657
      %vm659 = vcmp.lt.s32.totalorder %v640, 1
      %vm660 = vcmp.lt.s32.totalorder %v640, 2
      %vm661 = vcmp.lt.s32.totalorder %v640, 3
      %vm662 = vcmp.lt.s32.totalorder %v640, 4
      %v663 = vsel %vm659, %v643, %v646
      %v664 = vsel %vm662, %v652, 2102212464
      %v665 = vsel %vm661, %v649, %v664
      %v666 = vsel %vm660, %v663, %v665
      %v667 = vsel %vm659, %v646, %v649
      %v668 = vsel %vm662, %v655, 920167782
      %v669 = vsel %vm661, %v652, %v668
      %v670 = vsel %vm660, %v667, %v669
      %v671 = vsel %vm659, %v649, %v652
      %v672 = vsel %vm662, %v658, 1326507024
      %v673 = vsel %vm661, %v655, %v672
      %v674 = vsel %vm660, %v671, %v673
      %v675 = vshll.u32 %v635, 8
      %v676 = vmul.u32.u64.compose %v675, %v674
      %v677 = vextract.low.u32 %v676
      %v678 = vextract.high.u32 %v676
      %v679 = vmul.u32.u64.compose %v675, %v670
      %v680 = vextract.low.u32 %v679
      %v681 = vextract.high.u32 %v679
      %v682 = vmul.u32 %v675, %v666
      %v683 = vadd.s32 %v678, %v680
      %vm684 = vc.u32 %v678, %v680
      %v685 = vadd.s32 %v681, 1
      %v686 = vsel %vm684, %v685, %v681
      %v687 = vadd.s32 %v682, %v686
      %v688 = vadd.s32 %v687, 536870912
      %v689 = vshrl.u32 %v688, 30
      %v690 = vshll.u32 %v689, 30
      %v691 = vsub.s32 %v687, %v690
      %vm692 = vcmp.lt.s32.totalorder %v691, 0
      %v693 = vsub.s32 0, %v691
      %v694 = vsel %vm692, %v693, %v691
      %v695 = vclz %v694
      %v696 = vsub.s32 %v695, 2
      %vm697 = vcmp.gt.s32.totalorder 0, %v696
      %v698 = vsel %vm697, 0, %v696
      %v699 = vsub.s32 32, %v698
      %v700 = vshll.u32 %v691, %v698
      %v701 = vshrl.u32 %v683, %v699
      %v702 = vor.u32 %v700, %v701
      %v703 = vsub.s32 4294967266, %v698
      %v704 = vadd.s32 %v703, 127
      %v705 = vshll.u32 %v704, 23
      %v706 = vor.u32 4788187, %v705
      %v707 = vand.u32 2147483647, %v706
      %v709 = vcvt.s32.f32 %v702
      %v710 = vmul.f32 %v709, %v707
      %v711 = vxor.u32 %v710, 2147483648
      %v712 = vsel %vm629, %v711, %v710
      %v713 = vsub.s32 4, %v689
      %v714 = vsel %vm629, %v713, %v689
      %v715 = vsel %vm628, %v520, %v712
      %v716 = vsel %vm628, 0, %v714
      %v717 = vcosq.f32.pop %v715
      %v718 = vsinq.f32.pop %v715
      %vm719 = vweird.f32 %v520
      %v720 = vadd.s32 %v716, 3
      %v721 = vand.u32 %v720, 3
      %vm722 = vcmp.lt.s32.totalorder %v721, 2
      %vm723 = vcmp.eq.s32.totalorder %v721, 0
      %v724 = vxor.u32 %v718, 2147483648
      %v725 = vsel %vm723, %v717, %v724
      %vm726 = vcmp.eq.s32.totalorder %v721, 2
      %v727 = vxor.u32 %v717, 2147483648
      %v728 = vsel %vm726, %v727, %v718
      %v729 = vsel %vm722, %v725, %v728
      %v730 = vsel %vm719, nan, %v729
      %v731 = vand.u32 2147483647, %v521
      %vm732 = vcmp.le.f32.partialorder %v731, 0.7853982
      %vm733 = vcmp.lt.s32.totalorder %v521, 0
      %v734 = vand.u32 %v521, 2139095040
      %v735 = vshrl.u32 %v734, 23
      %v736 = vsub.s32 %v735, 127
      %v737 = vand.u32 2147483647, %v521
      %v738 = vand.u32 %v737, 8388607
      %v739 = vor.u32 %v738, 8388608
      %v740 = vsub.s32 0, %v739
      %v741 = vadd.s32 %v736, 1
      %vm742 = vcmp.gt.s32.totalorder %v741, 0
      %v743 = vsel %vm742, %v741, 0
      %v744 = vshrl.u32 %v743, 5
      %v745 = vand.u32 %v743, 31
      %v746 = vsub.s32 32, %v745
      %v747 = vshrl.u32 683565275, %v746
      %v748 = vshll.u32 683565275, %v745
      %v749 = vshrl.u32 2475754826, %v746
      %v750 = vor.u32 %v748, %v749
      %v751 = vshll.u32 2475754826, %v745
      %v752 = vshrl.u32 2131351028, %v746
      %v753 = vor.u32 %v751, %v752
      %v754 = vshll.u32 2131351028, %v745
      %v755 = vshrl.u32 2102212464, %v746
      %v756 = vor.u32 %v754, %v755
      %v757 = vshll.u32 2102212464, %v745
      %v758 = vshrl.u32 920167782, %v746
      %v759 = vor.u32 %v757, %v758
      %v760 = vshll.u32 920167782, %v745
      %v761 = vshrl.u32 1326507024, %v746
      %v762 = vor.u32 %v760, %v761
      %vm763 = vcmp.lt.s32.totalorder %v744, 1
      %vm764 = vcmp.lt.s32.totalorder %v744, 2
      %vm765 = vcmp.lt.s32.totalorder %v744, 3
      %vm766 = vcmp.lt.s32.totalorder %v744, 4
      %v767 = vsel %vm763, %v747, %v750
      %v768 = vsel %vm766, %v756, 2102212464
      %v769 = vsel %vm765, %v753, %v768
      %v770 = vsel %vm764, %v767, %v769
      %v771 = vsel %vm763, %v750, %v753
      %v772 = vsel %vm766, %v759, 920167782
      %v773 = vsel %vm765, %v756, %v772
      %v774 = vsel %vm764, %v771, %v773
      %v775 = vsel %vm763, %v753, %v756
      %v776 = vsel %vm766, %v762, 1326507024
      %v777 = vsel %vm765, %v759, %v776
      %v778 = vsel %vm764, %v775, %v777
      %v779 = vshll.u32 %v739, 8
      %v780 = vmul.u32.u64.compose %v779, %v778
      %v781 = vextract.low.u32 %v780
      %v782 = vextract.high.u32 %v780
      %v783 = vmul.u32.u64.compose %v779, %v774
      %v784 = vextract.low.u32 %v783
      %v785 = vextract.high.u32 %v783
      %v786 = vmul.u32 %v779, %v770
      %v787 = vadd.s32 %v782, %v784
      %vm788 = vc.u32 %v782, %v784
      %v789 = vadd.s32 %v785, 1
      %v790 = vsel %vm788, %v789, %v785
      %v791 = vadd.s32 %v786, %v790
      %v792 = vadd.s32 %v791, 536870912
      %v793 = vshrl.u32 %v792, 30
      %v794 = vshll.u32 %v793, 30
      %v795 = vsub.s32 %v791, %v794
      %vm796 = vcmp.lt.s32.totalorder %v795, 0
      %v797 = vsub.s32 0, %v795
      %v798 = vsel %vm796, %v797, %v795
      %v799 = vclz %v798
      %v800 = vsub.s32 %v799, 2
      %vm801 = vcmp.gt.s32.totalorder 0, %v800
      %v802 = vsel %vm801, 0, %v800
      %v803 = vsub.s32 32, %v802
      %v804 = vshll.u32 %v795, %v802
      %v805 = vshrl.u32 %v787, %v803
      %v806 = vor.u32 %v804, %v805
      %v807 = vsub.s32 4294967266, %v802
      %v808 = vadd.s32 %v807, 127
      %v809 = vshll.u32 %v808, 23
      %v810 = vor.u32 4788187, %v809
      %v811 = vand.u32 2147483647, %v810
      %v813 = vcvt.s32.f32 %v806
      %v814 = vmul.f32 %v813, %v811
      %v815 = vxor.u32 %v814, 2147483648
      %v816 = vsel %vm733, %v815, %v814
      %v817 = vsub.s32 4, %v793
      %v818 = vsel %vm733, %v817, %v793
      %v819 = vsel %vm732, %v521, %v816
      %v820 = vsel %vm732, 0, %v818
      %v821 = vcosq.f32.pop %v819
      %v822 = vsinq.f32.pop %v819
      %vm823 = vweird.f32 %v521
      %v824 = vadd.s32 %v820, 3
      %v825 = vand.u32 %v824, 3
      %vm826 = vcmp.lt.s32.totalorder %v825, 2
      %vm827 = vcmp.eq.s32.totalorder %v825, 0
      %v828 = vxor.u32 %v822, 2147483648
      %v829 = vsel %vm827, %v821, %v828
      %vm830 = vcmp.eq.s32.totalorder %v825, 2
      %v831 = vxor.u32 %v821, 2147483648
      %v832 = vsel %vm830, %v831, %v822
      %v833 = vsel %vm826, %v829, %v832
      %v834 = vsel %vm823, nan, %v833
      %v835 = vand.u32 2147483647, %v522
      %vm836 = vcmp.le.f32.partialorder %v835, 0.7853982
      %vm837 = vcmp.lt.s32.totalorder %v522, 0
      %v838 = vand.u32 %v522, 2139095040
      %v839 = vshrl.u32 %v838, 23
      %v840 = vsub.s32 %v839, 127
      %v841 = vand.u32 2147483647, %v522
      %v842 = vand.u32 %v841, 8388607
      %v843 = vor.u32 %v842, 8388608
      %v844 = vsub.s32 0, %v843
      %v845 = vadd.s32 %v840, 1
      %vm846 = vcmp.gt.s32.totalorder %v845, 0
      %v847 = vsel %vm846, %v845, 0
      %v848 = vshrl.u32 %v847, 5
      %v849 = vand.u32 %v847, 31
      %v850 = vsub.s32 32, %v849
      %v851 = vshrl.u32 683565275, %v850
      %v852 = vshll.u32 683565275, %v849
      %v853 = vshrl.u32 2475754826, %v850
      %v854 = vor.u32 %v852, %v853
      %v855 = vshll.u32 2475754826, %v849
      %v856 = vshrl.u32 2131351028, %v850
      %v857 = vor.u32 %v855, %v856
      %v858 = vshll.u32 2131351028, %v849
      %v859 = vshrl.u32 2102212464, %v850
      %v860 = vor.u32 %v858, %v859
      %v861 = vshll.u32 2102212464, %v849
      %v862 = vshrl.u32 920167782, %v850
      %v863 = vor.u32 %v861, %v862
      %v864 = vshll.u32 920167782, %v849
      %v865 = vshrl.u32 1326507024, %v850
      %v866 = vor.u32 %v864, %v865
      %vm867 = vcmp.lt.s32.totalorder %v848, 1
      %vm868 = vcmp.lt.s32.totalorder %v848, 2
      %vm869 = vcmp.lt.s32.totalorder %v848, 3
      %vm870 = vcmp.lt.s32.totalorder %v848, 4
      %v871 = vsel %vm867, %v851, %v854
      %v872 = vsel %vm870, %v860, 2102212464
      %v873 = vsel %vm869, %v857, %v872
      %v874 = vsel %vm868, %v871, %v873
      %v875 = vsel %vm867, %v854, %v857
      %v876 = vsel %vm870, %v863, 920167782
      %v877 = vsel %vm869, %v860, %v876
      %v878 = vsel %vm868, %v875, %v877
      %v879 = vsel %vm867, %v857, %v860
      %v880 = vsel %vm870, %v866, 1326507024
      %v881 = vsel %vm869, %v863, %v880
      %v882 = vsel %vm868, %v879, %v881
      %v883 = vshll.u32 %v843, 8
      %v884 = vmul.u32.u64.compose %v883, %v882
      %v885 = vextract.low.u32 %v884
      %v886 = vextract.high.u32 %v884
      %v887 = vmul.u32.u64.compose %v883, %v878
      %v888 = vextract.low.u32 %v887
      %v889 = vextract.high.u32 %v887
      %v890 = vmul.u32 %v883, %v874
      %v891 = vadd.s32 %v886, %v888
      %vm892 = vc.u32 %v886, %v888
      %v893 = vadd.s32 %v889, 1
      %v894 = vsel %vm892, %v893, %v889
      %v895 = vadd.s32 %v890, %v894
      %v896 = vadd.s32 %v895, 536870912
      %v897 = vshrl.u32 %v896, 30
      %v898 = vshll.u32 %v897, 30
      %v899 = vsub.s32 %v895, %v898
      %vm900 = vcmp.lt.s32.totalorder %v899, 0
      %v901 = vsub.s32 0, %v899
      %v902 = vsel %vm900, %v901, %v899
      %v903 = vclz %v902
      %v904 = vsub.s32 %v903, 2
      %vm905 = vcmp.gt.s32.totalorder 0, %v904
      %v906 = vsel %vm905, 0, %v904
      %v907 = vsub.s32 32, %v906
      %v908 = vshll.u32 %v899, %v906
      %v909 = vshrl.u32 %v891, %v907
      %v910 = vor.u32 %v908, %v909
      %v911 = vsub.s32 4294967266, %v906
      %v912 = vadd.s32 %v911, 127
      %v913 = vshll.u32 %v912, 23
      %v914 = vor.u32 4788187, %v913
      %v915 = vand.u32 2147483647, %v914
      %v917 = vcvt.s32.f32 %v910
      %v918 = vmul.f32 %v917, %v915
      %v919 = vxor.u32 %v918, 2147483648
      %v920 = vsel %vm837, %v919, %v918
      %v921 = vsub.s32 4, %v897
      %v922 = vsel %vm837, %v921, %v897
      %v923 = vsel %vm836, %v522, %v920
      %v924 = vsel %vm836, 0, %v922
      %v925 = vcosq.f32.pop %v923
      %v926 = vsinq.f32.pop %v923
      %vm927 = vweird.f32 %v522
      %v928 = vadd.s32 %v924, 3
      %v929 = vand.u32 %v928, 3
      %vm930 = vcmp.lt.s32.totalorder %v929, 2
      %vm931 = vcmp.eq.s32.totalorder %v929, 0
      %v932 = vxor.u32 %v926, 2147483648
      %v933 = vsel %vm931, %v925, %v932
      %vm934 = vcmp.eq.s32.totalorder %v929, 2
      %v935 = vxor.u32 %v925, 2147483648
      %v936 = vsel %vm934, %v935, %v926
      %v937 = vsel %vm930, %v933, %v936
      %v938 = vsel %vm927, nan, %v937
      %v939 = vand.u32 2147483647, %v519
      %vm940 = vcmp.le.f32.partialorder %v939, 0.7853982
      %vm941 = vcmp.lt.s32.totalorder %v519, 0
      %v942 = vand.u32 %v519, 2139095040
      %v943 = vshrl.u32 %v942, 23
      %v944 = vsub.s32 %v943, 127
      %v945 = vand.u32 2147483647, %v519
      %v946 = vand.u32 %v945, 8388607
      %v947 = vor.u32 %v946, 8388608
      %v948 = vsub.s32 0, %v947
      %v949 = vadd.s32 %v944, 1
      %vm950 = vcmp.gt.s32.totalorder %v949, 0
      %v951 = vsel %vm950, %v949, 0
      %v952 = vshrl.u32 %v951, 5
      %v953 = vand.u32 %v951, 31
      %v954 = vsub.s32 32, %v953
      %v955 = vshrl.u32 683565275, %v954
      %v956 = vshll.u32 683565275, %v953
      %v957 = vshrl.u32 2475754826, %v954
      %v958 = vor.u32 %v956, %v957
      %v959 = vshll.u32 2475754826, %v953
      %v960 = vshrl.u32 2131351028, %v954
      %v961 = vor.u32 %v959, %v960
      %v962 = vshll.u32 2131351028, %v953
      %v963 = vshrl.u32 2102212464, %v954
      %v964 = vor.u32 %v962, %v963
      %v965 = vshll.u32 2102212464, %v953
      %v966 = vshrl.u32 920167782, %v954
      %v967 = vor.u32 %v965, %v966
      %v968 = vshll.u32 920167782, %v953
      %v969 = vshrl.u32 1326507024, %v954
      %v970 = vor.u32 %v968, %v969
      %vm971 = vcmp.lt.s32.totalorder %v952, 1
      %vm972 = vcmp.lt.s32.totalorder %v952, 2
      %vm973 = vcmp.lt.s32.totalorder %v952, 3
      %vm974 = vcmp.lt.s32.totalorder %v952, 4
      %v975 = vsel %vm971, %v955, %v958
      %v976 = vsel %vm974, %v964, 2102212464
      %v977 = vsel %vm973, %v961, %v976
      %v978 = vsel %vm972, %v975, %v977
      %v979 = vsel %vm971, %v958, %v961
      %v980 = vsel %vm974, %v967, 920167782
      %v981 = vsel %vm973, %v964, %v980
      %v982 = vsel %vm972, %v979, %v981
      %v983 = vsel %vm971, %v961, %v964
      %v984 = vsel %vm974, %v970, 1326507024
      %v985 = vsel %vm973, %v967, %v984
      %v986 = vsel %vm972, %v983, %v985
      %v987 = vshll.u32 %v947, 8
      %v988 = vmul.u32.u64.compose %v987, %v986
      %v989 = vextract.low.u32 %v988
      %v990 = vextract.high.u32 %v988
      %v991 = vmul.u32.u64.compose %v987, %v982
      %v992 = vextract.low.u32 %v991
      %v993 = vextract.high.u32 %v991
      %v994 = vmul.u32 %v987, %v978
      %v995 = vadd.s32 %v990, %v992
      %vm996 = vc.u32 %v990, %v992
      %v997 = vadd.s32 %v993, 1
      %v998 = vsel %vm996, %v997, %v993
      %v999 = vadd.s32 %v994, %v998
      %v1000 = vadd.s32 %v999, 536870912
      %v1001 = vshrl.u32 %v1000, 30
      %v1002 = vshll.u32 %v1001, 30
      %v1003 = vsub.s32 %v999, %v1002
      %vm1004 = vcmp.lt.s32.totalorder %v1003, 0
      %v1005 = vsub.s32 0, %v1003
      %v1006 = vsel %vm1004, %v1005, %v1003
      %v1007 = vclz %v1006
      %v1008 = vsub.s32 %v1007, 2
      %vm1009 = vcmp.gt.s32.totalorder 0, %v1008
      %v1010 = vsel %vm1009, 0, %v1008
      %v1011 = vsub.s32 32, %v1010
      %v1012 = vshll.u32 %v1003, %v1010
      %v1013 = vshrl.u32 %v995, %v1011
      %v1014 = vor.u32 %v1012, %v1013
      %v1015 = vsub.s32 4294967266, %v1010
      %v1016 = vadd.s32 %v1015, 127
      %v1017 = vshll.u32 %v1016, 23
      %v1018 = vor.u32 4788187, %v1017
      %v1019 = vand.u32 2147483647, %v1018
      %v1021 = vcvt.s32.f32 %v1014
      %v1022 = vmul.f32 %v1021, %v1019
      %v1023 = vxor.u32 %v1022, 2147483648
      %v1024 = vsel %vm941, %v1023, %v1022
      %v1025 = vsub.s32 4, %v1001
      %v1026 = vsel %vm941, %v1025, %v1001
      %v1027 = vsel %vm940, %v519, %v1024
      %v1028 = vsel %vm940, 0, %v1026
      %v1029 = vcosq.f32.pop %v1027
      %v1030 = vsinq.f32.pop %v1027
      %vm1031 = vweird.f32 %v519
      %v1032 = vand.u32 %v1028, 3
      %vm1033 = vcmp.lt.s32.totalorder %v1032, 2
      %vm1034 = vcmp.eq.s32.totalorder %v1032, 0
      %v1035 = vxor.u32 %v1030, 2147483648
      %v1036 = vsel %vm1034, %v1029, %v1035
      %vm1037 = vcmp.eq.s32.totalorder %v1032, 2
      %v1038 = vxor.u32 %v1029, 2147483648
      %v1039 = vsel %vm1037, %v1038, %v1030
      %v1040 = vsel %vm1033, %v1036, %v1039
      %v1041 = vsel %vm1031, nan, %v1040
      %v1042 = vand.u32 2147483647, %v520
      %vm1043 = vcmp.le.f32.partialorder %v1042, 0.7853982
      %vm1044 = vcmp.lt.s32.totalorder %v520, 0
      %v1045 = vand.u32 %v520, 2139095040
      %v1046 = vshrl.u32 %v1045, 23
      %v1047 = vsub.s32 %v1046, 127
      %v1048 = vand.u32 2147483647, %v520
      %v1049 = vand.u32 %v1048, 8388607
      %v1050 = vor.u32 %v1049, 8388608
      %v1051 = vsub.s32 0, %v1050
      %v1052 = vadd.s32 %v1047, 1
      %vm1053 = vcmp.gt.s32.totalorder %v1052, 0
      %v1054 = vsel %vm1053, %v1052, 0
      %v1055 = vshrl.u32 %v1054, 5
      %v1056 = vand.u32 %v1054, 31
      %v1057 = vsub.s32 32, %v1056
      %v1058 = vshrl.u32 683565275, %v1057
      %v1059 = vshll.u32 683565275, %v1056
      %v1060 = vshrl.u32 2475754826, %v1057
      %v1061 = vor.u32 %v1059, %v1060
      %v1062 = vshll.u32 2475754826, %v1056
      %v1063 = vshrl.u32 2131351028, %v1057
      %v1064 = vor.u32 %v1062, %v1063
      %v1065 = vshll.u32 2131351028, %v1056
      %v1066 = vshrl.u32 2102212464, %v1057
      %v1067 = vor.u32 %v1065, %v1066
      %v1068 = vshll.u32 2102212464, %v1056
      %v1069 = vshrl.u32 920167782, %v1057
      %v1070 = vor.u32 %v1068, %v1069
      %v1071 = vshll.u32 920167782, %v1056
      %v1072 = vshrl.u32 1326507024, %v1057
      %v1073 = vor.u32 %v1071, %v1072
      %vm1074 = vcmp.lt.s32.totalorder %v1055, 1
      %vm1075 = vcmp.lt.s32.totalorder %v1055, 2
      %vm1076 = vcmp.lt.s32.totalorder %v1055, 3
      %vm1077 = vcmp.lt.s32.totalorder %v1055, 4
      %v1078 = vsel %vm1074, %v1058, %v1061
      %v1079 = vsel %vm1077, %v1067, 2102212464
      %v1080 = vsel %vm1076, %v1064, %v1079
      %v1081 = vsel %vm1075, %v1078, %v1080
      %v1082 = vsel %vm1074, %v1061, %v1064
      %v1083 = vsel %vm1077, %v1070, 920167782
      %v1084 = vsel %vm1076, %v1067, %v1083
      %v1085 = vsel %vm1075, %v1082, %v1084
      %v1086 = vsel %vm1074, %v1064, %v1067
      %v1087 = vsel %vm1077, %v1073, 1326507024
      %v1088 = vsel %vm1076, %v1070, %v1087
      %v1089 = vsel %vm1075, %v1086, %v1088
      %v1090 = vshll.u32 %v1050, 8
      %v1091 = vmul.u32.u64.compose %v1090, %v1089
      %v1092 = vextract.low.u32 %v1091
      %v1093 = vextract.high.u32 %v1091
      %v1094 = vmul.u32.u64.compose %v1090, %v1085
      %v1095 = vextract.low.u32 %v1094
      %v1096 = vextract.high.u32 %v1094
      %v1097 = vmul.u32 %v1090, %v1081
      %v1098 = vadd.s32 %v1093, %v1095
      %vm1099 = vc.u32 %v1093, %v1095
      %v1100 = vadd.s32 %v1096, 1
      %v1101 = vsel %vm1099, %v1100, %v1096
      %v1102 = vadd.s32 %v1097, %v1101
      %v1103 = vadd.s32 %v1102, 536870912
      %v1104 = vshrl.u32 %v1103, 30
      %v1105 = vshll.u32 %v1104, 30
      %v1106 = vsub.s32 %v1102, %v1105
      %vm1107 = vcmp.lt.s32.totalorder %v1106, 0
      %v1108 = vsub.s32 0, %v1106
      %v1109 = vsel %vm1107, %v1108, %v1106
      %v1110 = vclz %v1109
      %v1111 = vsub.s32 %v1110, 2
      %vm1112 = vcmp.gt.s32.totalorder 0, %v1111
      %v1113 = vsel %vm1112, 0, %v1111
      %v1114 = vsub.s32 32, %v1113
      %v1115 = vshll.u32 %v1106, %v1113
      %v1116 = vshrl.u32 %v1098, %v1114
      %v1117 = vor.u32 %v1115, %v1116
      %v1118 = vsub.s32 4294967266, %v1113
      %v1119 = vadd.s32 %v1118, 127
      %v1120 = vshll.u32 %v1119, 23
      %v1121 = vor.u32 4788187, %v1120
      %v1122 = vand.u32 2147483647, %v1121
      %v1124 = vcvt.s32.f32 %v1117
      %v1125 = vmul.f32 %v1124, %v1122
      %v1126 = vxor.u32 %v1125, 2147483648
      %v1127 = vsel %vm1044, %v1126, %v1125
      %v1128 = vsub.s32 4, %v1104
      %v1129 = vsel %vm1044, %v1128, %v1104
      %v1130 = vsel %vm1043, %v520, %v1127
      %v1131 = vsel %vm1043, 0, %v1129
      %v1132 = vcosq.f32.pop %v1130
      %v1133 = vsinq.f32.pop %v1130
      %vm1134 = vweird.f32 %v520
      %v1135 = vand.u32 %v1131, 3
      %vm1136 = vcmp.lt.s32.totalorder %v1135, 2
      %vm1137 = vcmp.eq.s32.totalorder %v1135, 0
      %v1138 = vxor.u32 %v1133, 2147483648
      %v1139 = vsel %vm1137, %v1132, %v1138
      %vm1140 = vcmp.eq.s32.totalorder %v1135, 2
      %v1141 = vxor.u32 %v1132, 2147483648
      %v1142 = vsel %vm1140, %v1141, %v1133
      %v1143 = vsel %vm1136, %v1139, %v1142
      %v1144 = vsel %vm1134, nan, %v1143
      %v1145 = vand.u32 2147483647, %v521
      %vm1146 = vcmp.le.f32.partialorder %v1145, 0.7853982
      %vm1147 = vcmp.lt.s32.totalorder %v521, 0
      %v1148 = vand.u32 %v521, 2139095040
      %v1149 = vshrl.u32 %v1148, 23
      %v1150 = vsub.s32 %v1149, 127
      %v1151 = vand.u32 2147483647, %v521
      %v1152 = vand.u32 %v1151, 8388607
      %v1153 = vor.u32 %v1152, 8388608
      %v1154 = vsub.s32 0, %v1153
      %v1155 = vadd.s32 %v1150, 1
      %vm1156 = vcmp.gt.s32.totalorder %v1155, 0
      %v1157 = vsel %vm1156, %v1155, 0
      %v1158 = vshrl.u32 %v1157, 5
      %v1159 = vand.u32 %v1157, 31
      %v1160 = vsub.s32 32, %v1159
      %v1161 = vshrl.u32 683565275, %v1160
      %v1162 = vshll.u32 683565275, %v1159
      %v1163 = vshrl.u32 2475754826, %v1160
      %v1164 = vor.u32 %v1162, %v1163
      %v1165 = vshll.u32 2475754826, %v1159
      %v1166 = vshrl.u32 2131351028, %v1160
      %v1167 = vor.u32 %v1165, %v1166
      %v1168 = vshll.u32 2131351028, %v1159
      %v1169 = vshrl.u32 2102212464, %v1160
      %v1170 = vor.u32 %v1168, %v1169
      %v1171 = vshll.u32 2102212464, %v1159
      %v1172 = vshrl.u32 920167782, %v1160
      %v1173 = vor.u32 %v1171, %v1172
      %v1174 = vshll.u32 920167782, %v1159
      %v1175 = vshrl.u32 1326507024, %v1160
      %v1176 = vor.u32 %v1174, %v1175
      %vm1177 = vcmp.lt.s32.totalorder %v1158, 1
      %vm1178 = vcmp.lt.s32.totalorder %v1158, 2
      %vm1179 = vcmp.lt.s32.totalorder %v1158, 3
      %vm1180 = vcmp.lt.s32.totalorder %v1158, 4
      %v1181 = vsel %vm1177, %v1161, %v1164
      %v1182 = vsel %vm1180, %v1170, 2102212464
      %v1183 = vsel %vm1179, %v1167, %v1182
      %v1184 = vsel %vm1178, %v1181, %v1183
      %v1185 = vsel %vm1177, %v1164, %v1167
      %v1186 = vsel %vm1180, %v1173, 920167782
      %v1187 = vsel %vm1179, %v1170, %v1186
      %v1188 = vsel %vm1178, %v1185, %v1187
      %v1189 = vsel %vm1177, %v1167, %v1170
      %v1190 = vsel %vm1180, %v1176, 1326507024
      %v1191 = vsel %vm1179, %v1173, %v1190
      %v1192 = vsel %vm1178, %v1189, %v1191
      %v1193 = vshll.u32 %v1153, 8
      %v1194 = vmul.u32.u64.compose %v1193, %v1192
      %v1195 = vextract.low.u32 %v1194
      %v1196 = vextract.high.u32 %v1194
      %v1197 = vmul.u32.u64.compose %v1193, %v1188
      %v1198 = vextract.low.u32 %v1197
      %v1199 = vextract.high.u32 %v1197
      %v1200 = vmul.u32 %v1193, %v1184
      %v1201 = vadd.s32 %v1196, %v1198
      %vm1202 = vc.u32 %v1196, %v1198
      %v1203 = vadd.s32 %v1199, 1
      %v1204 = vsel %vm1202, %v1203, %v1199
      %v1205 = vadd.s32 %v1200, %v1204
      %v1206 = vadd.s32 %v1205, 536870912
      %v1207 = vshrl.u32 %v1206, 30
      %v1208 = vshll.u32 %v1207, 30
      %v1209 = vsub.s32 %v1205, %v1208
      %vm1210 = vcmp.lt.s32.totalorder %v1209, 0
      %v1211 = vsub.s32 0, %v1209
      %v1212 = vsel %vm1210, %v1211, %v1209
      %v1213 = vclz %v1212
      %v1214 = vsub.s32 %v1213, 2
      %vm1215 = vcmp.gt.s32.totalorder 0, %v1214
      %v1216 = vsel %vm1215, 0, %v1214
      %v1217 = vsub.s32 32, %v1216
      %v1218 = vshll.u32 %v1209, %v1216
      %v1219 = vshrl.u32 %v1201, %v1217
      %v1220 = vor.u32 %v1218, %v1219
      %v1221 = vsub.s32 4294967266, %v1216
      %v1222 = vadd.s32 %v1221, 127
      %v1223 = vshll.u32 %v1222, 23
      %v1224 = vor.u32 4788187, %v1223
      %v1225 = vand.u32 2147483647, %v1224
      %v1227 = vcvt.s32.f32 %v1220
      %v1228 = vmul.f32 %v1227, %v1225
      %v1229 = vxor.u32 %v1228, 2147483648
      %v1230 = vsel %vm1147, %v1229, %v1228
      %v1231 = vsub.s32 4, %v1207
      %v1232 = vsel %vm1147, %v1231, %v1207
      %v1233 = vsel %vm1146, %v521, %v1230
      %v1234 = vsel %vm1146, 0, %v1232
      %v1235 = vcosq.f32.pop %v1233
      %v1236 = vsinq.f32.pop %v1233
      %vm1237 = vweird.f32 %v521
      %v1238 = vand.u32 %v1234, 3
      %vm1239 = vcmp.lt.s32.totalorder %v1238, 2
      %vm1240 = vcmp.eq.s32.totalorder %v1238, 0
      %v1241 = vxor.u32 %v1236, 2147483648
      %v1242 = vsel %vm1240, %v1235, %v1241
      %vm1243 = vcmp.eq.s32.totalorder %v1238, 2
      %v1244 = vxor.u32 %v1235, 2147483648
      %v1245 = vsel %vm1243, %v1244, %v1236
      %v1246 = vsel %vm1239, %v1242, %v1245
      %v1247 = vsel %vm1237, nan, %v1246
      %v1248 = vand.u32 2147483647, %v522
      %vm1249 = vcmp.le.f32.partialorder %v1248, 0.7853982
      %vm1250 = vcmp.lt.s32.totalorder %v522, 0
      %v1251 = vand.u32 %v522, 2139095040
      %v1252 = vshrl.u32 %v1251, 23
      %v1253 = vsub.s32 %v1252, 127
      %v1254 = vand.u32 2147483647, %v522
      %v1255 = vand.u32 %v1254, 8388607
      %v1256 = vor.u32 %v1255, 8388608
      %v1257 = vsub.s32 0, %v1256
      %v1258 = vadd.s32 %v1253, 1
      %vm1259 = vcmp.gt.s32.totalorder %v1258, 0
      %v1260 = vsel %vm1259, %v1258, 0
      %v1261 = vshrl.u32 %v1260, 5
      %v1262 = vand.u32 %v1260, 31
      %v1263 = vsub.s32 32, %v1262
      %v1264 = vshrl.u32 683565275, %v1263
      %v1265 = vshll.u32 683565275, %v1262
      %v1266 = vshrl.u32 2475754826, %v1263
      %v1267 = vor.u32 %v1265, %v1266
      %v1268 = vshll.u32 2475754826, %v1262
      %v1269 = vshrl.u32 2131351028, %v1263
      %v1270 = vor.u32 %v1268, %v1269
      %v1271 = vshll.u32 2131351028, %v1262
      %v1272 = vshrl.u32 2102212464, %v1263
      %v1273 = vor.u32 %v1271, %v1272
      %v1274 = vshll.u32 2102212464, %v1262
      %v1275 = vshrl.u32 920167782, %v1263
      %v1276 = vor.u32 %v1274, %v1275
      %v1277 = vshll.u32 920167782, %v1262
      %v1278 = vshrl.u32 1326507024, %v1263
      %v1279 = vor.u32 %v1277, %v1278
      %vm1280 = vcmp.lt.s32.totalorder %v1261, 1
      %vm1281 = vcmp.lt.s32.totalorder %v1261, 2
      %vm1282 = vcmp.lt.s32.totalorder %v1261, 3
      %vm1283 = vcmp.lt.s32.totalorder %v1261, 4
      %v1284 = vsel %vm1280, %v1264, %v1267
      %v1285 = vsel %vm1283, %v1273, 2102212464
      %v1286 = vsel %vm1282, %v1270, %v1285
      %v1287 = vsel %vm1281, %v1284, %v1286
      %v1288 = vsel %vm1280, %v1267, %v1270
      %v1289 = vsel %vm1283, %v1276, 920167782
      %v1290 = vsel %vm1282, %v1273, %v1289
      %v1291 = vsel %vm1281, %v1288, %v1290
      %v1292 = vsel %vm1280, %v1270, %v1273
      %v1293 = vsel %vm1283, %v1279, 1326507024
      %v1294 = vsel %vm1282, %v1276, %v1293
      %v1295 = vsel %vm1281, %v1292, %v1294
      %v1296 = vshll.u32 %v1256, 8
      %v1297 = vmul.u32.u64.compose %v1296, %v1295
      %v1298 = vextract.low.u32 %v1297
      %v1299 = vextract.high.u32 %v1297
      %v1300 = vmul.u32.u64.compose %v1296, %v1291
      %v1301 = vextract.low.u32 %v1300
      %v1302 = vextract.high.u32 %v1300
      %v1303 = vmul.u32 %v1296, %v1287
      %v1304 = vadd.s32 %v1299, %v1301
      %vm1305 = vc.u32 %v1299, %v1301
      %v1306 = vadd.s32 %v1302, 1
      %v1307 = vsel %vm1305, %v1306, %v1302
      %v1308 = vadd.s32 %v1303, %v1307
      %v1309 = vadd.s32 %v1308, 536870912
      %v1310 = vshrl.u32 %v1309, 30
      %v1311 = vshll.u32 %v1310, 30
      %v1312 = vsub.s32 %v1308, %v1311
      %vm1313 = vcmp.lt.s32.totalorder %v1312, 0
      %v1314 = vsub.s32 0, %v1312
      %v1315 = vsel %vm1313, %v1314, %v1312
      %v1316 = vclz %v1315
      %v1317 = vsub.s32 %v1316, 2
      %vm1318 = vcmp.gt.s32.totalorder 0, %v1317
      %v1319 = vsel %vm1318, 0, %v1317
      %v1320 = vsub.s32 32, %v1319
      %v1321 = vshll.u32 %v1312, %v1319
      %v1322 = vshrl.u32 %v1304, %v1320
      %v1323 = vor.u32 %v1321, %v1322
      %v1324 = vsub.s32 4294967266, %v1319
      %v1325 = vadd.s32 %v1324, 127
      %v1326 = vshll.u32 %v1325, 23
      %v1327 = vor.u32 4788187, %v1326
      %v1328 = vand.u32 2147483647, %v1327
      %v1330 = vcvt.s32.f32 %v1323
      %v1331 = vmul.f32 %v1330, %v1328
      %v1332 = vxor.u32 %v1331, 2147483648
      %v1333 = vsel %vm1250, %v1332, %v1331
      %v1334 = vsub.s32 4, %v1310
      %v1335 = vsel %vm1250, %v1334, %v1310
      %v1336 = vsel %vm1249, %v522, %v1333
      %v1337 = vsel %vm1249, 0, %v1335
      %v1338 = vcosq.f32.pop %v1336
      %v1339 = vsinq.f32.pop %v1336
      %vm1340 = vweird.f32 %v522
      %v1341 = vand.u32 %v1337, 3
      %vm1342 = vcmp.lt.s32.totalorder %v1341, 2
      %vm1343 = vcmp.eq.s32.totalorder %v1341, 0
      %v1344 = vxor.u32 %v1339, 2147483648
      %v1345 = vsel %vm1343, %v1338, %v1344
      %vm1346 = vcmp.eq.s32.totalorder %v1341, 2
      %v1347 = vxor.u32 %v1338, 2147483648
      %v1348 = vsel %vm1346, %v1347, %v1339
      %v1349 = vsel %vm1342, %v1345, %v1348
      %v1350 = vsel %vm1340, nan, %v1349
      %v1351 = vld [vmem:[%s3] sm:$0xff]
      %v1352 = vld [vmem:[%s3 + $0x8] sm:$0xff]
      %v1353 = vld [vmem:[%s3 + $0x10] sm:$0xff]
      %v1354 = vld [vmem:[%s3 + $0x18] sm:$0xff]
      %v1355 = vld [vmem:[%s4] sm:$0xff]
      %v1356 = vld [vmem:[%s4 + $0x8] sm:$0xff]
      %v1357 = vld [vmem:[%s4 + $0x10] sm:$0xff]
      %v1358 = vld [vmem:[%s4 + $0x18] sm:$0xff]
      %v1359 = vld [vmem:[%s4 + $0x20] sm:$0xff]
      %v1360 = vld [vmem:[%s4 + $0x28] sm:$0xff]
      %v1361 = vld [vmem:[%s4 + $0x30] sm:$0xff]
      %v1362 = vld [vmem:[%s4 + $0x38] sm:$0xff]
      %v1363 = vld [vmem:[%s4 + $0x40] sm:$0xff]
      %v1364 = vld [vmem:[%s4 + $0x48] sm:$0xff]
      %v1365 = vld [vmem:[%s4 + $0x50] sm:$0xff]
      %v1366 = vld [vmem:[%s4 + $0x58] sm:$0xff]
      %v1367 = vld [vmem:[%s4 + $0x60] sm:$0xff]
      %v1368 = vld [vmem:[%s4 + $0x68] sm:$0xff]
      %vm1369 = vcmask 457728
      %v1371 = vsel %vm1369, %v626, 0
      %v1374 = vsel %vm1369, %v730, 0
      %v1377 = vsel %vm1369, %v834, 0
      %v1380 = vsel %vm1369, %v938, 0
      %1382 = vmatprep.subr.mxu0 0.0
      %1383 = vmatpush1.msra.mxu0 0.0
      %1384 = vmatprep.subr.mxu0 0.0
      %1385 = vmatpush1.msra.mxu0 0.0
      %1386 = vmatprep.subr.mxu0 0.0
      %1387 = vmatpush1.msra.mxu0 0.0
      %1388 = vmatprep.subr.mxu0 0.0
      %1389 = vmatpush1.msra.mxu0 0.0
      %1390 = vmatprep.subr.mxu0 0.0
      %1391 = vmatpush1.msra.mxu0 0.0
      %1392 = vmatprep.subr.mxu0 0.0
      %1393 = vmatpush1.msra.mxu0 0.0
      %1394 = vmatprep.subr.mxu0 0.0
      %1395 = vmatpush1.msra.mxu0 0.0
      %1396 = vmatprep.subr.mxu0 0.0
      %1397 = vmatpush1.msra.mxu0 0.0
      %1398 = vmatprep.subr.mxu0 0.0
      %1399 = vmatpush1.msra.mxu0 0.0
      %1400 = vmatprep.subr.mxu0 %v1368
      %1401 = vmatpush1.msra.mxu0 %v1367
      %1402 = vmatprep.subr.mxu0 %v1366
      %1403 = vmatpush1.msra.mxu0 %v1365
      %1404 = vmatprep.subr.mxu0 %v1364
      %1405 = vmatpush1.msra.mxu0 %v1363
      %1406 = vmatprep.subr.mxu0 %v1362
      %1407 = vmatpush1.msra.mxu0 %v1361
      %1408 = vmatprep.subr.mxu0 %v1360
      %1409 = vmatpush1.msra.mxu0 %v1359
      %1410 = vmatprep.subr.mxu0 %v1358
      %1411 = vmatpush1.msra.mxu0 %v1357
      %1412 = vmatprep.subr.mxu0 %v1356
      %1413 = vmatpush1.msra.mxu0 %v1355
      %1414 = vmatprep.subr.mxu0 0.0
      %1415 = vmatpush2.msra.mxu0 0.0
      %1416 = vmatprep.subr.mxu0 0.0
      %1417 = vmatpush2.msra.mxu0 0.0
      %1418 = vmatprep.subr.mxu0 0.0
      %1419 = vmatpush2.msra.mxu0 0.0
      %1420 = vmatprep.subr.mxu0 0.0
      %1421 = vmatpush2.msra.mxu0 0.0
      %1422 = vmatprep.subr.mxu0 0.0
      %1423 = vmatpush2.msra.mxu0 0.0
      %1424 = vmatprep.subr.mxu0 0.0
      %1425 = vmatpush2.msra.mxu0 0.0
      %1426 = vmatprep.subr.mxu0 0.0
      %1427 = vmatpush2.msra.mxu0 0.0
      %1428 = vmatprep.subr.mxu0 0.0
      %1429 = vmatpush2.msra.mxu0 0.0
      %1430 = vmatprep.subr.mxu0 0.0
      %1431 = vmatpush2.msra.mxu0 0.0
      %1432 = vmatprep.subr.mxu0 0.0
      %1433 = vmatpush2.msra.mxu0 0.0
      %1434 = vmatprep.subr.mxu0 0.0
      %1435 = vmatpush2.msra.mxu0 0.0
      %1436 = vmatprep.subr.mxu0 0.0
      %1437 = vmatpush2.msra.mxu0 0.0
      %1438 = vmatprep.subr.mxu0 0.0
      %1439 = vmatpush2.msra.mxu0 0.0
      %1440 = vmatprep.subr.mxu0 0.0
      %1441 = vmatpush2.msra.mxu0 0.0
      %1442 = vmatprep.subr.mxu0 0.0
      %1443 = vmatpush2.msra.mxu0 0.0
      %1444 = vmatprep.subr.mxu0 0.0
      %1445 = vmatpush2.msra.mxu0 0.0
      %1446 = vmatprep.mubr.f32.mxu0 0.0
      %1447 = vmatmul.mubr.f32.gmra.mxu0 %v1371
      %v1448 = vpop.f32.mrf.mxu0
      %v1449 = vadd.f32 0.0, %v1448
      %v1450 = vpop.f32.mrf.mxu0
      %v1451 = vadd.f32 0.0, %v1450
      %1452 = vmatprep.mubr.f32.mxu0 0.0
      %1453 = vmatmul.mubr.f32.gmra.mxu0 %v1374
      %v1454 = vpop.f32.mrf.mxu0
      %v1455 = vadd.f32 0.0, %v1454
      %v1456 = vpop.f32.mrf.mxu0
      %v1457 = vadd.f32 0.0, %v1456
      %1458 = vmatprep.mubr.f32.mxu0 0.0
      %1459 = vmatmul.mubr.f32.gmra.mxu0 %v1377
      %v1460 = vpop.f32.mrf.mxu0
      %v1461 = vadd.f32 0.0, %v1460
      %v1462 = vpop.f32.mrf.mxu0
      %v1463 = vadd.f32 0.0, %v1462
      %1464 = vmatprep.mubr.f32.mxu0 0.0
      %1465 = vmatmul.mubr.f32.gmra.mxu0 %v1380
      %v1466 = vpop.f32.mrf.mxu0
      %v1467 = vadd.f32 0.0, %v1466
      %v1468 = vpop.f32.mrf.mxu0
      %v1469 = vadd.f32 0.0, %v1468
      %1470 = vdwg.mxu0
      %vm1471 = vcmask 130048
      %v1472 = vsel %vm1471, %v414, 0
      %v1474 = vsel %vm1471, %v415, 0
      %v1476 = vsel %vm1471, %v416, 0
      %v1478 = vsel %vm1471, %v417, 0
      %1480 = vmatprep.subr.mxu0 0.0
      %1481 = vmatpush1.msra.mxu0 0.0
      %1482 = vmatprep.subr.mxu0 0.0
      %1483 = vmatpush1.msra.mxu0 0.0
      %1484 = vmatprep.subr.mxu0 0.0
      %1485 = vmatpush1.msra.mxu0 0.0
      %1486 = vmatprep.subr.mxu0 0.0
      %1487 = vmatpush1.msra.mxu0 0.0
      %1488 = vmatprep.subr.mxu0 0.0
      %1489 = vmatpush1.msra.mxu0 0.0
      %1490 = vmatprep.subr.mxu0 0.0
      %1491 = vmatpush1.msra.mxu0 0.0
      %1492 = vmatprep.subr.mxu0 0.0
      %1493 = vmatpush1.msra.mxu0 0.0
      %1494 = vmatprep.subr.mxu0 0.0
      %1495 = vmatpush1.msra.mxu0 0.0
      %1496 = vmatprep.subr.mxu0 0.0
      %1497 = vmatpush1.msra.mxu0 0.0
      %1498 = vmatprep.subr.mxu0 0.0
      %1499 = vmatpush1.msra.mxu0 0.0
      %1500 = vmatprep.subr.mxu0 0.0
      %1501 = vmatpush1.msra.mxu0 0.0
      %1502 = vmatprep.subr.mxu0 0.0
      %1503 = vmatpush1.msra.mxu0 0.0
      %1504 = vmatprep.subr.mxu0 0.0
      %1505 = vmatpush1.msra.mxu0 0.0
      %1506 = vmatprep.subr.mxu0 0.0
      %1507 = vmatpush1.msra.mxu0 0.0
      %1508 = vmatprep.subr.mxu0 %v1354
      %1509 = vmatpush1.msra.mxu0 %v1353
      %1510 = vmatprep.subr.mxu0 %v1352
      %1511 = vmatpush1.msra.mxu0 %v1351
      %1512 = vmatprep.subr.mxu0 0.0
      %1513 = vmatpush2.msra.mxu0 0.0
      %1514 = vmatprep.subr.mxu0 0.0
      %1515 = vmatpush2.msra.mxu0 0.0
      %1516 = vmatprep.subr.mxu0 0.0
      %1517 = vmatpush2.msra.mxu0 0.0
      %1518 = vmatprep.subr.mxu0 0.0
      %1519 = vmatpush2.msra.mxu0 0.0
      %1520 = vmatprep.subr.mxu0 0.0
      %1521 = vmatpush2.msra.mxu0 0.0
      %1522 = vmatprep.subr.mxu0 0.0
      %1523 = vmatpush2.msra.mxu0 0.0
      %1524 = vmatprep.subr.mxu0 0.0
      %1525 = vmatpush2.msra.mxu0 0.0
      %1526 = vmatprep.subr.mxu0 0.0
      %1527 = vmatpush2.msra.mxu0 0.0
      %1528 = vmatprep.subr.mxu0 0.0
      %1529 = vmatpush2.msra.mxu0 0.0
      %1530 = vmatprep.subr.mxu0 0.0
      %1531 = vmatpush2.msra.mxu0 0.0
      %1532 = vmatprep.subr.mxu0 0.0
      %1533 = vmatpush2.msra.mxu0 0.0
      %1534 = vmatprep.subr.mxu0 0.0
      %1535 = vmatpush2.msra.mxu0 0.0
      %1536 = vmatprep.subr.mxu0 0.0
      %1537 = vmatpush2.msra.mxu0 0.0
      %1538 = vmatprep.subr.mxu0 0.0
      %1539 = vmatpush2.msra.mxu0 0.0
      %1540 = vmatprep.subr.mxu0 0.0
      %1541 = vmatpush2.msra.mxu0 0.0
      %1542 = vmatprep.subr.mxu0 0.0
      %1543 = vmatpush2.msra.mxu0 0.0
      %1544 = vmatprep.mubr.f32.mxu0 0.0
      %1545 = vmatmul.mubr.f32.gmra.mxu0 %v1472
      %v1546 = vpop.f32.mrf.mxu0
      %v1547 = vadd.f32 %v1449, %v1546
      %v1548 = vpop.f32.mrf.mxu0
      %v1549 = vadd.f32 %v1451, %v1548
      %1550 = vmatprep.mubr.f32.mxu0 0.0
      %1551 = vmatmul.mubr.f32.gmra.mxu0 %v1474
      %v1552 = vpop.f32.mrf.mxu0
      %v1553 = vadd.f32 %v1455, %v1552
      %v1554 = vpop.f32.mrf.mxu0
      %v1555 = vadd.f32 %v1457, %v1554
      %1556 = vmatprep.mubr.f32.mxu0 0.0
      %1557 = vmatmul.mubr.f32.gmra.mxu0 %v1476
      %v1558 = vpop.f32.mrf.mxu0
      %v1559 = vadd.f32 %v1461, %v1558
      %v1560 = vpop.f32.mrf.mxu0
      %v1561 = vadd.f32 %v1463, %v1560
      %1562 = vmatprep.mubr.f32.mxu0 0.0
      %1563 = vmatmul.mubr.f32.gmra.mxu0 %v1478
      %v1564 = vpop.f32.mrf.mxu0
      %v1565 = vadd.f32 %v1467, %v1564
      %v1566 = vpop.f32.mrf.mxu0
      %v1567 = vadd.f32 %v1469, %v1566
      %1568 = vdwg.mxu0
      %v1569 = vld [vmem:[%s5] sm:$0xff]
      %v1570 = vld [vmem:[%s5 + $0x8] sm:$0xff]
      %v1571 = vld [vmem:[%s5 + $0x10] sm:$0xff]
      %v1572 = vld [vmem:[%s5 + $0x18] sm:$0xff]
      %v1573 = vld [vmem:[%s5 + $0x20] sm:$0xff]
      %v1574 = vld [vmem:[%s5 + $0x28] sm:$0xff]
      %v1575 = vld [vmem:[%s5 + $0x30] sm:$0xff]
      %v1576 = vld [vmem:[%s5 + $0x38] sm:$0xff]
      %v1577 = vld [vmem:[%s5 + $0x40] sm:$0xff]
      %v1578 = vld [vmem:[%s5 + $0x48] sm:$0xff]
      %v1579 = vld [vmem:[%s5 + $0x50] sm:$0xff]
      %v1580 = vld [vmem:[%s5 + $0x58] sm:$0xff]
      %v1581 = vld [vmem:[%s5 + $0x60] sm:$0xff]
      %v1582 = vld [vmem:[%s5 + $0x68] sm:$0xff]
      %v1584 = vsel %vm1369, %v1041, 0
      %v1587 = vsel %vm1369, %v1144, 0
      %v1590 = vsel %vm1369, %v1247, 0
      %v1593 = vsel %vm1369, %v1350, 0
      %1595 = vmatprep.subr.mxu0 0.0
      %1596 = vmatpush1.msra.mxu0 0.0
      %1597 = vmatprep.subr.mxu0 0.0
      %1598 = vmatpush1.msra.mxu0 0.0
      %1599 = vmatprep.subr.mxu0 0.0
      %1600 = vmatpush1.msra.mxu0 0.0
      %1601 = vmatprep.subr.mxu0 0.0
      %1602 = vmatpush1.msra.mxu0 0.0
      %1603 = vmatprep.subr.mxu0 0.0
      %1604 = vmatpush1.msra.mxu0 0.0
      %1605 = vmatprep.subr.mxu0 0.0
      %1606 = vmatpush1.msra.mxu0 0.0
      %1607 = vmatprep.subr.mxu0 0.0
      %1608 = vmatpush1.msra.mxu0 0.0
      %1609 = vmatprep.subr.mxu0 0.0
      %1610 = vmatpush1.msra.mxu0 0.0
      %1611 = vmatprep.subr.mxu0 0.0
      %1612 = vmatpush1.msra.mxu0 0.0
      %1613 = vmatprep.subr.mxu0 %v1582
      %1614 = vmatpush1.msra.mxu0 %v1581
      %1615 = vmatprep.subr.mxu0 %v1580
      %1616 = vmatpush1.msra.mxu0 %v1579
      %1617 = vmatprep.subr.mxu0 %v1578
      %1618 = vmatpush1.msra.mxu0 %v1577
      %1619 = vmatprep.subr.mxu0 %v1576
      %1620 = vmatpush1.msra.mxu0 %v1575
      %1621 = vmatprep.subr.mxu0 %v1574
      %1622 = vmatpush1.msra.mxu0 %v1573
      %1623 = vmatprep.subr.mxu0 %v1572
      %1624 = vmatpush1.msra.mxu0 %v1571
      %1625 = vmatprep.subr.mxu0 %v1570
      %1626 = vmatpush1.msra.mxu0 %v1569
      %1627 = vmatprep.subr.mxu0 0.0
      %1628 = vmatpush2.msra.mxu0 0.0
      %1629 = vmatprep.subr.mxu0 0.0
      %1630 = vmatpush2.msra.mxu0 0.0
      %1631 = vmatprep.subr.mxu0 0.0
      %1632 = vmatpush2.msra.mxu0 0.0
      %1633 = vmatprep.subr.mxu0 0.0
      %1634 = vmatpush2.msra.mxu0 0.0
      %1635 = vmatprep.subr.mxu0 0.0
      %1636 = vmatpush2.msra.mxu0 0.0
      %1637 = vmatprep.subr.mxu0 0.0
      %1638 = vmatpush2.msra.mxu0 0.0
      %1639 = vmatprep.subr.mxu0 0.0
      %1640 = vmatpush2.msra.mxu0 0.0
      %1641 = vmatprep.subr.mxu0 0.0
      %1642 = vmatpush2.msra.mxu0 0.0
      %1643 = vmatprep.subr.mxu0 0.0
      %1644 = vmatpush2.msra.mxu0 0.0
      %1645 = vmatprep.subr.mxu0 0.0
      %1646 = vmatpush2.msra.mxu0 0.0
      %1647 = vmatprep.subr.mxu0 0.0
      %1648 = vmatpush2.msra.mxu0 0.0
      %1649 = vmatprep.subr.mxu0 0.0
      %1650 = vmatpush2.msra.mxu0 0.0
      %1651 = vmatprep.subr.mxu0 0.0
      %1652 = vmatpush2.msra.mxu0 0.0
      %1653 = vmatprep.subr.mxu0 0.0
      %1654 = vmatpush2.msra.mxu0 0.0
      %1655 = vmatprep.subr.mxu0 0.0
      %1656 = vmatpush2.msra.mxu0 0.0
      %1657 = vmatprep.subr.mxu0 0.0
      %1658 = vmatpush2.msra.mxu0 0.0
      %1659 = vmatprep.mubr.f32.mxu0 0.0
      %1660 = vmatmul.mubr.f32.gmra.mxu0 %v1584
      %v1661 = vpop.f32.mrf.mxu0
      %v1662 = vadd.f32 0.0, %v1661
      %v1663 = vpop.f32.mrf.mxu0
      %v1664 = vadd.f32 0.0, %v1663
      %1665 = vmatprep.mubr.f32.mxu0 0.0
      %1666 = vmatmul.mubr.f32.gmra.mxu0 %v1587
      %v1667 = vpop.f32.mrf.mxu0
      %v1668 = vadd.f32 0.0, %v1667
      %v1669 = vpop.f32.mrf.mxu0
      %v1670 = vadd.f32 0.0, %v1669
      %1671 = vmatprep.mubr.f32.mxu0 0.0
      %1672 = vmatmul.mubr.f32.gmra.mxu0 %v1590
      %v1673 = vpop.f32.mrf.mxu0
      %v1674 = vadd.f32 0.0, %v1673
      %v1675 = vpop.f32.mrf.mxu0
      %v1676 = vadd.f32 0.0, %v1675
      %1677 = vmatprep.mubr.f32.mxu0 0.0
      %1678 = vmatmul.mubr.f32.gmra.mxu0 %v1593
      %v1679 = vpop.f32.mrf.mxu0
      %v1680 = vadd.f32 0.0, %v1679
      %v1681 = vpop.f32.mrf.mxu0
      %v1682 = vadd.f32 0.0, %v1681
      %1683 = vdwg.mxu0
      %v1684 = vadd.f32 %v1547, %v1662
      %v1685 = vadd.f32 %v1549, %v1664
      %v1686 = vadd.f32 %v1553, %v1668
      %v1687 = vadd.f32 %v1555, %v1670
      %v1688 = vadd.f32 %v1559, %v1674
      %v1689 = vadd.f32 %v1561, %v1676
      %v1690 = vadd.f32 %v1565, %v1680
      %v1691 = vadd.f32 %v1567, %v1682
      %v1692 = vld [vmem:[%s6] sm:$0x3]
      %v1694 = vlaneseq
      %v1695 = vshrl.u32 %v1694, 7
      %v1696 = vsub.s32 0, %v1695
      %v1697 = vrot.slane %v1692, %v1696
      %v1698 = vlaneseq
      %v1699 = vshrl.u32 %v1698, 7
      %v1700 = vsub.s32 1, %v1699
      %v1701 = vrot.slane %v1692, %v1700
      %v1704 = vadd.f32 %v1684, %v1697
      %v1705 = vadd.f32 %v1685, %v1701
      %v1706 = vadd.f32 %v1686, %v1697
      %v1707 = vadd.f32 %v1687, %v1701
      %v1708 = vadd.f32 %v1688, %v1697
      %v1709 = vadd.f32 %v1689, %v1701
      %v1710 = vadd.f32 %v1690, %v1697
      %v1711 = vadd.f32 %v1691, %v1701
      %v1712 = vld [vmem:[%s7] sm:$0x3]
      %v1713 = vmul.f32 %v1704, %v1704
      %v1714 = vmul.f32 %v1705, %v1705
      %v1715 = vmul.f32 %v1706, %v1706
      %v1716 = vmul.f32 %v1707, %v1707
      %v1717 = vmul.f32 %v1708, %v1708
      %v1718 = vmul.f32 %v1709, %v1709
      %v1719 = vmul.f32 %v1710, %v1710
      %v1720 = vmul.f32 %v1711, %v1711
      %v1721 = vadd.f32 %v1713, %v1714
      %1722 = vadd.xlane.f32.xlu0 %v1721
      %v1723 = vpop.xlane.xlu0 %1722
      %v1724 = vadd.f32 %v1715, %v1716
      %1725 = vadd.xlane.f32.xlu0 %v1724
      %v1726 = vpop.xlane.xlu0 %1725
      %v1727 = vadd.f32 %v1717, %v1718
      %1728 = vadd.xlane.f32.xlu0 %v1727
      %v1729 = vpop.xlane.xlu0 %1728
      %v1730 = vadd.f32 %v1719, %v1720
      %1731 = vadd.xlane.f32.xlu0 %v1730
      %v1732 = vpop.xlane.xlu0 %1731
      %v1733 = vrcp.pop 256.0
      %v1734 = vmul.f32 %v1723, %v1733
      %v1735 = vmul.f32 %v1726, %v1733
      %v1736 = vmul.f32 %v1729, %v1733
      %v1737 = vmul.f32 %v1732, %v1733
      %v1738 = vadd.f32 %v1734, 1e-06
      %v1739 = vadd.f32 %v1735, 1e-06
      %v1740 = vadd.f32 %v1736, 1e-06
      %v1741 = vadd.f32 %v1737, 1e-06
      %v1742 = vrsqrt.pop %v1738
      %v1743 = vrsqrt.pop %v1739
      %v1744 = vrsqrt.pop %v1740
      %v1745 = vrsqrt.pop %v1741
      %v1746 = vmul.f32 %v1704, %v1742
      %v1747 = vmul.f32 %v1705, %v1742
      %v1748 = vmul.f32 %v1706, %v1743
      %v1749 = vmul.f32 %v1707, %v1743
      %v1750 = vmul.f32 %v1708, %v1744
      %v1751 = vmul.f32 %v1709, %v1744
      %v1752 = vmul.f32 %v1710, %v1745
      %v1753 = vmul.f32 %v1711, %v1745
      %v1755 = vlaneseq
      %v1756 = vshrl.u32 %v1755, 7
      %v1757 = vsub.s32 0, %v1756
      %v1758 = vrot.slane %v1712, %v1757
      %v1759 = vlaneseq
      %v1760 = vshrl.u32 %v1759, 7
      %v1761 = vsub.s32 1, %v1760
      %v1762 = vrot.slane %v1712, %v1761
      %v1765 = vmul.f32 %v1746, %v1758
      %v1766 = vmul.f32 %v1747, %v1762
      %v1767 = vmul.f32 %v1748, %v1758
      %v1768 = vmul.f32 %v1749, %v1762
      %v1769 = vmul.f32 %v1750, %v1758
      %v1770 = vmul.f32 %v1751, %v1762
      %v1771 = vmul.f32 %v1752, %v1758
      %v1772 = vmul.f32 %v1753, %v1762
      %v1773 = vld [vmem:[%s405] sm:$0xff]
      %v1774 = vld [vmem:[%s405 + $0x8] sm:$0xff]
      %v1775 = vld [vmem:[%s405 + $0x10] sm:$0xff]
      %v1776 = vld [vmem:[%s405 + $0x18] sm:$0xff]
      %v1777 = vld [vmem:[%s8] sm:$0xff]
      %v1778 = vld [vmem:[%s8 + $0x8] sm:$0xff]
      %v1779 = vld [vmem:[%s8 + $0x10] sm:$0xff]
      %v1780 = vld [vmem:[%s8 + $0x18] sm:$0xff]
      %v1781 = vld [vmem:[%s9] sm:$0x3]
      %v1783 = vlaneseq
      %v1784 = vshrl.u32 %v1783, 7
      %v1785 = vsub.s32 0, %v1784
      %v1786 = vrot.slane %v1781, %v1785
      %v1787 = vlaneseq
      %v1788 = vshrl.u32 %v1787, 7
      %v1789 = vsub.s32 1, %v1788
      %v1790 = vrot.slane %v1781, %v1789
      %v1794 = vsel %vm1471, %v1773, 0
      %v1797 = vsel %vm1471, %v1774, 0
      %v1800 = vsel %vm1471, %v1775, 0
      %v1803 = vsel %vm1471, %v1776, 0
      %1805 = vmatprep.subr.mxu0 0.0
      %1806 = vmatpush1.msra.mxu0 0.0
      %1807 = vmatprep.subr.mxu0 0.0
      %1808 = vmatpush1.msra.mxu0 0.0
      %1809 = vmatprep.subr.mxu0 0.0
      %1810 = vmatpush1.msra.mxu0 0.0
      %1811 = vmatprep.subr.mxu0 0.0
      %1812 = vmatpush1.msra.mxu0 0.0
      %1813 = vmatprep.subr.mxu0 0.0
      %1814 = vmatpush1.msra.mxu0 0.0
      %1815 = vmatprep.subr.mxu0 0.0
      %1816 = vmatpush1.msra.mxu0 0.0
      %1817 = vmatprep.subr.mxu0 0.0
      %1818 = vmatpush1.msra.mxu0 0.0
      %1819 = vmatprep.subr.mxu0 0.0
      %1820 = vmatpush1.msra.mxu0 0.0
      %1821 = vmatprep.subr.mxu0 0.0
      %1822 = vmatpush1.msra.mxu0 0.0
      %1823 = vmatprep.subr.mxu0 0.0
      %1824 = vmatpush1.msra.mxu0 0.0
      %1825 = vmatprep.subr.mxu0 0.0
      %1826 = vmatpush1.msra.mxu0 0.0
      %1827 = vmatprep.subr.mxu0 0.0
      %1828 = vmatpush1.msra.mxu0 0.0
      %1829 = vmatprep.subr.mxu0 0.0
      %1830 = vmatpush1.msra.mxu0 0.0
      %1831 = vmatprep.subr.mxu0 0.0
      %1832 = vmatpush1.msra.mxu0 0.0
      %1833 = vmatprep.subr.mxu0 %v1780
      %1834 = vmatpush1.msra.mxu0 %v1779
      %1835 = vmatprep.subr.mxu0 %v1778
      %1836 = vmatpush1.msra.mxu0 %v1777
      %1837 = vmatprep.subr.mxu0 0.0
      %1838 = vmatpush2.msra.mxu0 0.0
      %1839 = vmatprep.subr.mxu0 0.0
      %1840 = vmatpush2.msra.mxu0 0.0
      %1841 = vmatprep.subr.mxu0 0.0
      %1842 = vmatpush2.msra.mxu0 0.0
      %1843 = vmatprep.subr.mxu0 0.0
      %1844 = vmatpush2.msra.mxu0 0.0
      %1845 = vmatprep.subr.mxu0 0.0
      %1846 = vmatpush2.msra.mxu0 0.0
      %1847 = vmatprep.subr.mxu0 0.0
      %1848 = vmatpush2.msra.mxu0 0.0
      %1849 = vmatprep.subr.mxu0 0.0
      %1850 = vmatpush2.msra.mxu0 0.0
      %1851 = vmatprep.subr.mxu0 0.0
      %1852 = vmatpush2.msra.mxu0 0.0
      %1853 = vmatprep.subr.mxu0 0.0
      %1854 = vmatpush2.msra.mxu0 0.0
      %1855 = vmatprep.subr.mxu0 0.0
      %1856 = vmatpush2.msra.mxu0 0.0
      %1857 = vmatprep.subr.mxu0 0.0
      %1858 = vmatpush2.msra.mxu0 0.0
      %1859 = vmatprep.subr.mxu0 0.0
      %1860 = vmatpush2.msra.mxu0 0.0
      %1861 = vmatprep.subr.mxu0 0.0
      %1862 = vmatpush2.msra.mxu0 0.0
      %1863 = vmatprep.subr.mxu0 0.0
      %1864 = vmatpush2.msra.mxu0 0.0
      %1865 = vmatprep.subr.mxu0 0.0
      %1866 = vmatpush2.msra.mxu0 0.0
      %1867 = vmatprep.subr.mxu0 0.0
      %1868 = vmatpush2.msra.mxu0 0.0
      %1869 = vmatprep.mubr.f32.mxu0 0.0
      %1870 = vmatmul.mubr.f32.gmra.mxu0 %v1794
      %v1871 = vpop.f32.mrf.mxu0
      %v1872 = vadd.f32 %v1786, %v1871
      %v1873 = vpop.f32.mrf.mxu0
      %v1874 = vadd.f32 %v1790, %v1873
      %1875 = vmatprep.mubr.f32.mxu0 0.0
      %1876 = vmatmul.mubr.f32.gmra.mxu0 %v1797
      %v1877 = vpop.f32.mrf.mxu0
      %v1878 = vadd.f32 %v1786, %v1877
      %v1879 = vpop.f32.mrf.mxu0
      %v1880 = vadd.f32 %v1790, %v1879
      %1881 = vmatprep.mubr.f32.mxu0 0.0
      %1882 = vmatmul.mubr.f32.gmra.mxu0 %v1800
      %v1883 = vpop.f32.mrf.mxu0
      %v1884 = vadd.f32 %v1786, %v1883
      %v1885 = vpop.f32.mrf.mxu0
      %v1886 = vadd.f32 %v1790, %v1885
      %1887 = vmatprep.mubr.f32.mxu0 0.0
      %1888 = vmatmul.mubr.f32.gmra.mxu0 %v1803
      %v1889 = vpop.f32.mrf.mxu0
      %v1890 = vadd.f32 %v1786, %v1889
      %v1891 = vpop.f32.mrf.mxu0
      %v1892 = vadd.f32 %v1790, %v1891
      %1893 = vdwg.mxu0
      %v1894 = vld [vmem:[%s10] sm:$0x3]
      %v1895 = vmul.f32 %v1872, %v1872
      %v1896 = vmul.f32 %v1874, %v1874
      %v1897 = vmul.f32 %v1878, %v1878
      %v1898 = vmul.f32 %v1880, %v1880
      %v1899 = vmul.f32 %v1884, %v1884
      %v1900 = vmul.f32 %v1886, %v1886
      %v1901 = vmul.f32 %v1890, %v1890
      %v1902 = vmul.f32 %v1892, %v1892
      %v1903 = vadd.f32 %v1895, %v1896
      %1904 = vadd.xlane.f32.xlu0 %v1903
      %v1905 = vpop.xlane.xlu0 %1904
      %v1906 = vadd.f32 %v1897, %v1898
      %1907 = vadd.xlane.f32.xlu0 %v1906
      %v1908 = vpop.xlane.xlu0 %1907
      %v1909 = vadd.f32 %v1899, %v1900
      %1910 = vadd.xlane.f32.xlu0 %v1909
      %v1911 = vpop.xlane.xlu0 %1910
      %v1912 = vadd.f32 %v1901, %v1902
      %1913 = vadd.xlane.f32.xlu0 %v1912
      %v1914 = vpop.xlane.xlu0 %1913
      %v1915 = vmul.f32 %v1905, %v1733
      %v1916 = vmul.f32 %v1908, %v1733
      %v1917 = vmul.f32 %v1911, %v1733
      %v1918 = vmul.f32 %v1914, %v1733
      %v1919 = vadd.f32 %v1915, 1e-06
      %v1920 = vadd.f32 %v1916, 1e-06
      %v1921 = vadd.f32 %v1917, 1e-06
      %v1922 = vadd.f32 %v1918, 1e-06
      %v1923 = vrsqrt.pop %v1919
      %v1924 = vrsqrt.pop %v1920
      %v1925 = vrsqrt.pop %v1921
      %v1926 = vrsqrt.pop %v1922
      %v1927 = vmul.f32 %v1872, %v1923
      %v1928 = vmul.f32 %v1874, %v1923
      %v1929 = vmul.f32 %v1878, %v1924
      %v1930 = vmul.f32 %v1880, %v1924
      %v1931 = vmul.f32 %v1884, %v1925
      %v1932 = vmul.f32 %v1886, %v1925
      %v1933 = vmul.f32 %v1890, %v1926
      %v1934 = vmul.f32 %v1892, %v1926
      %v1936 = vlaneseq
      %v1937 = vshrl.u32 %v1936, 7
      %v1938 = vsub.s32 0, %v1937
      %v1939 = vrot.slane %v1894, %v1938
      %v1940 = vlaneseq
      %v1941 = vshrl.u32 %v1940, 7
      %v1942 = vsub.s32 1, %v1941
      %v1943 = vrot.slane %v1894, %v1942
      %v1946 = vmul.f32 %v1927, %v1939
      %v1947 = vmul.f32 %v1928, %v1943
      %v1948 = vmul.f32 %v1929, %v1939
      %v1949 = vmul.f32 %v1930, %v1943
      %v1950 = vmul.f32 %v1931, %v1939
      %v1951 = vmul.f32 %v1932, %v1943
      %v1952 = vmul.f32 %v1933, %v1939
      %v1953 = vmul.f32 %v1934, %v1943
      %v1954 = vadd.f32 %v1765, %v1946
      %v1955 = vadd.f32 %v1766, %v1947
      %v1956 = vadd.f32 %v1767, %v1948
      %v1957 = vadd.f32 %v1768, %v1949
      %v1958 = vadd.f32 %v1769, %v1950
      %v1959 = vadd.f32 %v1770, %v1951
      %v1960 = vadd.f32 %v1771, %v1952
      %v1961 = vadd.f32 %v1772, %v1953
      %1962 = vst [vmem:[%s412] sm:$0xff] %v1954
      %1963 = vst [vmem:[%s412 + $0x8] sm:$0xff] %v1955
      %1964 = vst [vmem:[%s412 + $0x10] sm:$0xff] %v1956
      %1965 = vst [vmem:[%s412 + $0x18] sm:$0xff] %v1957
      %1966 = vst [vmem:[%s412 + $0x20] sm:$0xff] %v1958
      %1967 = vst [vmem:[%s412 + $0x28] sm:$0xff] %v1959
      %1968 = vst [vmem:[%s412 + $0x30] sm:$0xff] %v1960
      %1969 = vst [vmem:[%s412 + $0x38] sm:$0xff] %v1961
      %s1970 = smul.u32 4, %s22
      %p1971 = scmp.lt.s32.totalorder %s1970, 31
      %s1972 = scalar_select %p1971, %s1970, 31
      %s1973 = smul.addr %s1972, 2
      %s1974 = smul.addr %s1973, 8
      %s1975 = scalar_lea.vmem %s11, %s1974
      // Predicated region
      $region65: #{triangle_embedding.1} parent=63 // pred_check
        %p1976 = pneg %p281
      $region66: #{triangle_embedding.1} parent=63 // pred_check_branch
        %1978 = sbr.rel (%p1976) target = $region68
      $region67: #{triangle_embedding.1} parent=63 // pred_region
        %s1979 = smul.u32 4, %s22
      $region68: #{triangle_embedding.1} parent=63 // pred_fallthru
        _
    $region64: #{triangle_embedding.1} parent=5 // pred_fallthru
      _
    %p1980 = scmp.le.s32.totalorder 2, %s17
    // Predicated region
    $region69: #{triangle_embedding.1} parent=5 // pred_check
      %p1981 = pneg %p1980
    $region70: #{triangle_embedding.1} parent=5 // pred_check_branch
      %1983 = sbr.rel (%p1981) target = $region72
    $region71: #{triangle_embedding.1} parent=5 // pred_region
      %s1984 = ssub.s32 %s17, 2
      // Predicated region
      $region73: #{triangle_embedding.1} parent=71 // pred_check
        %p1985 = pneg %p287
      $region74: #{triangle_embedding.1} parent=71 // pred_check_branch
        %1987 = sbr.rel (%p1985) target = $region76
      $region75: #{triangle_embedding.1} parent=71 // pred_region
        %s1988 = smul.u32 4, %s23
        %p1989 = scmp.lt.s32.totalorder %s1988, 31
        %s1990 = scalar_select %p1989, %s1988, 31
        %s1991 = smul.addr %s1990, 2
        %s1992 = smul.addr %s1991, 8
        %s1993 = scalar_lea.vmem %s11, %s1992
      $region76: #{triangle_embedding.1} parent=71 // pred_fallthru
        _
    $region72: #{triangle_embedding.1} parent=5 // pred_fallthru
      _
  $region6: #{triangle_embedding.1} parent=0 // loop_footer
    %s21 = sadd.s32 1, %s17
  $region7: #{triangle_embedding.1} parent=0 // loop_footer_branch
    %16 = sbr.rel target = $region3
  $region8: #{triangle_embedding.1} parent=0 // loop_exit
    _

</llo_original>
